<compile_context>
chip_gen: v7x
topology: tpu7x:2x2x1
jax: 0.10.0
libtpu: 0.0.40
codegen_flags: <defaults>
</compile_context>

<pallas_src>
import math
import jax
import jax.numpy as jnp
from jax.experimental import pallas as pl
from jax.experimental.pallas import tpu as pltpu


def sage_kernel(adj_ref, xk_ref, xi_ref, inv_deg_ref, ws_ref, wn_ref,
                out_ref, acc_ref):
    """Grid = (row tiles i, source/K tiles k). K (axis 1) is the reduction axis.

    adj_ref     : (tm, tk)      int8   binary adjacency tile (0/1)
    xk_ref      : (tk, D_in)    bf16   neighbor-feature tile (varies with k)
    xi_ref      : (tm, D_in)    bf16   self-feature tile (constant in k -> resident)
    inv_deg_ref : (tm, 1)       f32    per-row 1/in_degree (0 for isolated nodes)
    ws_ref      : (D_in, D_out) bf16   W_self^T (pre-transposed, padded)
    wn_ref      : (D_in, D_out) bf16   W_neigh^T (pre-transposed, padded)
    out_ref     : (tm, D_out)   f32
    acc_ref     : (tm, D_in)    f32    VMEM accumulator for adj @ x
    """
    k = pl.program_id(1)

    @pl.when(k == 0)
    def _init():
        acc_ref[...] = jnp.zeros_like(acc_ref)

    # Dominant matmul: int8 adjacency upcast to bf16 on the VPU (0/1 exact),
    # bf16 x bf16 on the MXU with f32 accumulation.  Two-step cast via f32 is
    # the most robustly lowered convert chain on all generations.
    adj_bf = adj_ref[...].astype(jnp.float32).astype(jnp.bfloat16)
    acc_ref[...] += jnp.dot(adj_bf, xk_ref[...],
                            preferred_element_type=jnp.float32)

    @pl.when(k == pl.num_programs(1) - 1)
    def _finalize():
        # Exact f32 mean normalization, then bf16 epilogue projections
        # (single-pass MXU) with f32 accumulation.
        h_neigh = (acc_ref[...] * inv_deg_ref[...]).astype(jnp.bfloat16)
        out_ref[...] = (
            jnp.dot(xi_ref[...], ws_ref[...],
                    preferred_element_type=jnp.float32)
            + jnp.dot(h_neigh, wn_ref[...],
                      preferred_element_type=jnp.float32)
        ).astype(out_ref.dtype)


def _pick_tm(n):
    # Prefer big tiles, but keep >= 2 row tiles so the 'parallel' axis can
    # shard across both TensorCores on v7x.
    cands = [c for c in (1024, 512, 256, 128) if n % c == 0]
    two_tile = [c for c in cands if n // c >= 2]
    if two_tile:
        return two_tile[0]
    if cands:
        return cands[0]
    return n


def _pick_tk(n):
    cands = [c for c in (2048, 1024, 512, 256, 128) if n % c == 0]
    return cands[0] if cands else n


def sage_conv(adj, x, w_self, w_neigh, *, tm=None, tk=None):
    """adj: (N, N) dense binary adjacency, adj[dst, src] = 1 if edge src->dst.
    x: (N, D_in) node features.  w_self / w_neigh: (D_out, D_in) Linear weights
    (bias=False, matching the reference module)."""
    N, D_in = x.shape
    D_out = w_self.shape[0]

    if tm is None:
        tm = _pick_tm(N)
    if tk is None:
        tk = _pick_tk(N)
    assert N % tm == 0 and N % tk == 0, "N must be a multiple of the tile sizes"

    # Binary adjacency -> int8 (exact), halving the dominant HBM stream.
    adj_i8 = adj.astype(jnp.int8)

    # Per-row inverse in-degree in f32 (0 for isolated nodes, like DGL mean).
    in_deg = jnp.sum(adj.astype(jnp.float32), axis=1, keepdims=True)
    inv_deg = jnp.where(in_deg > 0, 1.0 / jnp.maximum(in_deg, 1.0), 0.0)
    inv_deg = inv_deg.astype(jnp.float32)

    # bf16 feature stream; f32 accumulation happens in-kernel.
    x_bf = x.astype(jnp.bfloat16)

    # Pre-transposed bf16 weights, padded to a lane-dense output width.
    d_out_pad = ((D_out + 127) // 128) * 128
    ws_t = w_self.T.astype(jnp.bfloat16)
    wn_t = w_neigh.T.astype(jnp.bfloat16)
    if d_out_pad != D_out:
        ws_t = jnp.pad(ws_t, ((0, 0), (0, d_out_pad - D_out)))
        wn_t = jnp.pad(wn_t, ((0, 0), (0, d_out_pad - D_out)))

    grid = (N // tm, N // tk)

    out = pl.pallas_call(
        sage_kernel,
        out_shape=jax.ShapeDtypeStruct((N, d_out_pad), jnp.float32),
        grid_spec=pltpu.PrefetchScalarGridSpec(
            num_scalar_prefetch=0,
            grid=grid,
            in_specs=[
                # adjacency tile: rows i, source columns k (int8)
                pl.BlockSpec((tm, tk), lambda i, k: (i, k)),
                # neighbor-feature K tile
                pl.BlockSpec((tk, D_in), lambda i, k: (k, 0)),
                # self-feature tile (constant in k -> fetched once per row tile)
                pl.BlockSpec((tm, D_in), lambda i, k: (i, 0)),
                # per-row 1/in_deg (constant in k)
                pl.BlockSpec((tm, 1), lambda i, k: (i, 0)),
                # pre-transposed weights (grid-invariant)
                pl.BlockSpec((D_in, d_out_pad), lambda i, k: (0, 0)),
                pl.BlockSpec((D_in, d_out_pad), lambda i, k: (0, 0)),
            ],
            out_specs=pl.BlockSpec((tm, d_out_pad), lambda i, k: (i, 0)),
            scratch_shapes=[pltpu.VMEM((tm, D_in), jnp.float32)],
        ),
        compiler_params=pltpu.CompilerParams(
            dimension_semantics=("parallel", "arbitrary"),
            vmem_limit_bytes=32 * 1024 * 1024,  # tiles well under this (incl. v7x)
        ),
    )(adj_i8, x_bf, x_bf, inv_deg, ws_t, wn_t)

    return out if d_out_pad == D_out else out[:, :D_out]


def xavier_uniform(key, shape, gain):
    # matches torch.nn.init.xavier_uniform_ for a (fan_out, fan_in) Linear weight
    fan_out, fan_in = shape
    bound = gain * math.sqrt(6.0 / (fan_in + fan_out))
    return jax.random.uniform(key, shape, jnp.float32, -bound, bound)


if __name__ == "__main__":
    N, D_in, D_out = 512, 128, 128
    key = jax.random.PRNGKey(0)
    k_feat, k_edge, k_ws, k_wn = jax.random.split(key, 4)

    # node features
    x = jax.random.normal(k_feat, (N, D_in), jnp.float32)

    # random directed graph -> dense binary adjacency: adj[dst, src] = 1 if edge
    adj = (jax.random.uniform(k_edge, (N, N)) < 0.1).astype(jnp.float32)

    # xavier_uniform_ with gain = calculate_gain('relu') = sqrt(2)
    gain = math.sqrt(2.0)
    w_self = xavier_uniform(k_ws, (D_out, D_in), gain)
    w_neigh = xavier_uniform(k_wn, (D_out, D_in), gain)

    out = sage_conv(adj, x, w_self, w_neigh)
    out = jax.block_until_ready(out)

    # Reference computed with the same intentional precision choices the kernel
    # makes (bf16 features/weights, exact binary adjacency, f32 degree scale,
    # bf16 h_neigh into the second projection), so differences are only f32
    # accumulation-order noise.
    x_bf32 = x.astype(jnp.bfloat16).astype(jnp.float32)
    ws_bf32 = w_self.astype(jnp.bfloat16).astype(jnp.float32)
    wn_bf32 = w_neigh.astype(jnp.bfloat16).astype(jnp.float32)
    in_deg = jnp.sum(adj, axis=1, keepdims=True)
    inv_deg = jnp.where(in_deg > 0, 1.0 / jnp.maximum(in_deg, 1.0), 0.0)
    h_neigh = (adj @ x_bf32) * inv_deg
    h_neigh = h_neigh.astype(jnp.bfloat16).astype(jnp.float32)
    ref = x_bf32 @ ws_bf32.T + h_neigh @ wn_bf32.T

    assert out.shape == (N, D_out)
    assert jnp.allclose(out, ref, atol=1e-2, rtol=1e-2)

    print("KERNEL_OK")
</pallas_src>

<mosaic_0001>
module attributes {stable_mosaic.version = 11 : i64} {
  func.func @sage_kernel(%arg0: i32, %arg1: i32, %arg2: memref<256x512xi8, #tpu.memory_space<vmem>>, %arg3: memref<512x128xbf16, #tpu.memory_space<vmem>>, %arg4: memref<256x128xbf16, #tpu.memory_space<vmem>>, %arg5: memref<256x1xf32, #tpu.memory_space<vmem>>, %arg6: memref<128x128xbf16, #tpu.memory_space<vmem>>, %arg7: memref<128x128xbf16, #tpu.memory_space<vmem>>, %arg8: memref<256x128xf32, #tpu.memory_space<vmem>>, %arg9: memref<256x128xf32, #tpu.memory_space<vmem>>) attributes {dimension_semantics = [#tpu.dimension_semantics<parallel>, #tpu.dimension_semantics<arbitrary>], iteration_bounds = array<i64: 2, 1>, scalar_prefetch = 0 : i64, scratch_operands = 1 : i64, tpu.core_type = #tpu.core_type<tc>, window_params = [{transform_indices = @transform_0, window_bounds = array<i64: 256, 512>}, {transform_indices = @transform_1, window_bounds = array<i64: 512, 128>}, {transform_indices = @transform_2, window_bounds = array<i64: 256, 128>}, {transform_indices = @transform_3, window_bounds = array<i64: 256, 1>}, {pipeline_mode = #tpu.pipeline_mode<synchronous>, transform_indices = @transform_4, window_bounds = array<i64: 128, 128>}, {pipeline_mode = #tpu.pipeline_mode<synchronous>, transform_indices = @transform_5, window_bounds = array<i64: 128, 128>}, {transform_indices = @transform_6, window_bounds = array<i64: 256, 128>}]} {
    %c0_i32 = arith.constant 0 : i32
    %0 = arith.cmpi eq, %arg1, %c0_i32 : i32
    %1 = arith.extui %0 : i1 to i32
    %c0_i32_0 = arith.constant 0 : i32
    %2 = arith.cmpi ne, %1, %c0_i32_0 : i32
    scf.if %2 {
      %cst_10 = arith.constant 0.000000e+00 : f32
      %14 = vector.broadcast %cst_10 : f32 to vector<256x128xf32>
      %c0_11 = arith.constant 0 : index
      %c0_12 = arith.constant 0 : index
      %15 = vector.load %arg9[%c0_11, %c0_12] : memref<256x128xf32, #tpu.memory_space<vmem>>, vector<256x128xf32>
      tpu.vector_store %arg9[%c0_11, %c0_12], %14 {strides = array<i32>} : memref<256x128xf32, #tpu.memory_space<vmem>>, vector<256x128xf32>,
    } else {
    }
    %c0 = arith.constant 0 : index
    %c0_1 = arith.constant 0 : index
    %3 = vector.load %arg2[%c0, %c0_1] : memref<256x512xi8, #tpu.memory_space<vmem>>, vector<256x512xi8>
    %4 = arith.sitofp %3 : vector<256x512xi8> to vector<256x512xf32>
    %5 = arith.truncf %4 : vector<256x512xf32> to vector<256x512xbf16>
    %c0_2 = arith.constant 0 : index
    %c0_3 = arith.constant 0 : index
    %6 = vector.load %arg9[%c0_2, %c0_3] : memref<256x128xf32, #tpu.memory_space<vmem>>, vector<256x128xf32>
    %c0_4 = arith.constant 0 : index
    %c0_5 = arith.constant 0 : index
    %7 = vector.load %arg3[%c0_4, %c0_5] : memref<512x128xbf16, #tpu.memory_space<vmem>>, vector<512x128xbf16>
    %cst = arith.constant dense<0.000000e+00> : vector<256x128xf32>
    %8 = tpu.matmul %5, %7, %cst {dimension_numbers = #tpu.dot_dimension_numbers<[1], [0], [0], [1], [0, 0, 1, 1], [], []>} : vector<256x512xbf16>, vector<512x128xbf16>, vector<256x128xf32> -> vector<256x128xf32>
    %9 = arith.addf %6, %8 : vector<256x128xf32>
    %c0_6 = arith.constant 0 : index
    %c0_7 = arith.constant 0 : index
    %10 = vector.load %arg9[%c0_6, %c0_7] : memref<256x128xf32, #tpu.memory_space<vmem>>, vector<256x128xf32>
    tpu.vector_store %arg9[%c0_6, %c0_7], %9 {strides = array<i32>} : memref<256x128xf32, #tpu.memory_space<vmem>>, vector<256x128xf32>,
    %c0_i32_8 = arith.constant 0 : i32
    %11 = arith.cmpi eq, %arg1, %c0_i32_8 : i32
    %12 = arith.extui %11 : i1 to i32
    %c0_i32_9 = arith.constant 0 : i32
    %13 = arith.cmpi ne, %12, %c0_i32_9 : i32
    scf.if %13 {
      %c0_10 = arith.constant 0 : index
      %c0_11 = arith.constant 0 : index
      %14 = vector.load %arg9[%c0_10, %c0_11] : memref<256x128xf32, #tpu.memory_space<vmem>>, vector<256x128xf32>
      %c0_12 = arith.constant 0 : index
      %c0_13 = arith.constant 0 : index
      %15 = vector.load %arg5[%c0_12, %c0_13] : memref<256x1xf32, #tpu.memory_space<vmem>>, vector<256x1xf32>
      %16 = vector.broadcast %15 : vector<256x1xf32> to vector<256x128xf32>
      %17 = arith.mulf %14, %16 : vector<256x128xf32>
      %18 = arith.truncf %17 : vector<256x128xf32> to vector<256x128xbf16>
      %c0_14 = arith.constant 0 : index
      %c0_15 = arith.constant 0 : index
      %19 = vector.load %arg4[%c0_14, %c0_15] : memref<256x128xbf16, #tpu.memory_space<vmem>>, vector<256x128xbf16>
      %c0_16 = arith.constant 0 : index
      %c0_17 = arith.constant 0 : index
      %20 = vector.load %arg6[%c0_16, %c0_17] : memref<128x128xbf16, #tpu.memory_space<vmem>>, vector<128x128xbf16>
      %cst_18 = arith.constant dense<0.000000e+00> : vector<256x128xf32>
      %21 = tpu.matmul %19, %20, %cst_18 {dimension_numbers = #tpu.dot_dimension_numbers<[1], [0], [0], [1], [0, 0, 1, 1], [], []>} : vector<256x128xbf16>, vector<128x128xbf16>, vector<256x128xf32> -> vector<256x128xf32>
      %c0_19 = arith.constant 0 : index
      %c0_20 = arith.constant 0 : index
      %22 = vector.load %arg7[%c0_19, %c0_20] : memref<128x128xbf16, #tpu.memory_space<vmem>>, vector<128x128xbf16>
      %cst_21 = arith.constant dense<0.000000e+00> : vector<256x128xf32>
      %23 = tpu.matmul %18, %22, %cst_21 {dimension_numbers = #tpu.dot_dimension_numbers<[1], [0], [0], [1], [0, 0, 1, 1], [], []>} : vector<256x128xbf16>, vector<128x128xbf16>, vector<256x128xf32> -> vector<256x128xf32>
      %24 = arith.addf %21, %23 : vector<256x128xf32>
      %c0_22 = arith.constant 0 : index
      %c0_23 = arith.constant 0 : index
      %25 = vector.load %arg8[%c0_22, %c0_23] : memref<256x128xf32, #tpu.memory_space<vmem>>, vector<256x128xf32>
      tpu.vector_store %arg8[%c0_22, %c0_23], %24 {strides = array<i32>} : memref<256x128xf32, #tpu.memory_space<vmem>>, vector<256x128xf32>,
    } else {
    }
    return
  }
  func.func @transform_0(%arg0: i32, %arg1: i32) -> (i32, i32) {
    %c0_i32 = arith.constant 0 : i32
    return %arg0, %arg1 : i32, i32
  }
  func.func @transform_1(%arg0: i32, %arg1: i32) -> (i32, i32) {
    %c0_i32 = arith.constant 0 : i32
    %c0_i32_0 = arith.constant 0 : i32
    return %arg1, %c0_i32 : i32, i32
  }
  func.func @transform_2(%arg0: i32, %arg1: i32) -> (i32, i32) {
    %c0_i32 = arith.constant 0 : i32
    %c0_i32_0 = arith.constant 0 : i32
    return %arg0, %c0_i32 : i32, i32
  }
  func.func @transform_3(%arg0: i32, %arg1: i32) -> (i32, i32) {
    %c0_i32 = arith.constant 0 : i32
    %c0_i32_0 = arith.constant 0 : i32
    return %arg0, %c0_i32 : i32, i32
  }
  func.func @transform_4(%arg0: i32, %arg1: i32) -> (i32, i32) {
    %c0_i32 = arith.constant 0 : i32
    %c0_i32_0 = arith.constant 0 : i32
    %c0_i32_1 = arith.constant 0 : i32
    return %c0_i32, %c0_i32_0 : i32, i32
  }
  func.func @transform_5(%arg0: i32, %arg1: i32) -> (i32, i32) {
    %c0_i32 = arith.constant 0 : i32
    %c0_i32_0 = arith.constant 0 : i32
    %c0_i32_1 = arith.constant 0 : i32
    return %c0_i32, %c0_i32_0 : i32, i32
  }
  func.func @transform_6(%arg0: i32, %arg1: i32) -> (i32, i32) {
    %c0_i32 = arith.constant 0 : i32
    %c0_i32_0 = arith.constant 0 : i32
    return %arg0, %c0_i32 : i32, i32
  }
}

</mosaic_0001>

<llo_original>
// kernel: tpu_custom_call.1
$region0: #{tpu_custom_call.1}
  #allocation0 [shape = 'u32[]', space=smem, size = 0x4, offset = 0x4, fixed_abs, tag = 'smem constant byte address 0x4 - core index']
  #allocation1 [shape = 'u32[144,128]{1,0:T(1,128)}', space=vmem, size = 0x12000, scoped, tag = 'internal scratch']
  #allocation2 [shape = 'f32[256,128]{1,0:T(8,128)}', space=vmem, size = 0x20000, scoped, tag = 'scratch operand']
  %s0 = inlined_call_operand.vmem [shape: s8[512,512], index: 0, kind: input, shape index: {}]
  %s1 = inlined_call_operand.hbm [shape: bf16[512,128], index: 1, kind: input, shape index: {}]
  %s2 = inlined_call_operand.hbm [shape: bf16[512,128], index: 2, kind: input, shape index: {}]
  %s3 = inlined_call_operand.vmem [shape: f32[512,1], index: 3, kind: input, shape index: {}]
  %s4 = inlined_call_operand.hbm [shape: bf16[128,128], index: 4, kind: input, shape index: {}]
  %s5 = inlined_call_operand.hbm [shape: bf16[128,128], index: 5, kind: input, shape index: {}]
  %s6 = inlined_call_operand.hbm [shape: f32[512,128], index: 6, kind: output, shape index: {}]
  %s7 = sld [smem:[#allocation0]]
  $region81: #{tpu_custom_call.1} parent=0
    _
  %s9 = ssub.s32 1, %s7
  %s10 = scalar_select 0, %s9, %s7
  $region1: #{tpu_custom_call.1} parent=0
    #allocation3 [shape = 'u8[131072]{0}', space=vmem, size = 0x20000, scoped, tag = 'input window, operand 1, single buffered']
    #allocation4 [shape = 's32[2]{0}', space=sflag, size = 0x8, scoped, tag = 'scoped memory for tpu_custom_call.1']
    #allocation5 [shape = 's32[2]{0}', space=sflag, size = 0x8, scoped, tag = 'scoped memory for tpu_custom_call.1']
    #allocation6 [shape = 'u8[131072]{0}', space=vmem, size = 0x20000, scoped, tag = 'input window, operand 2']
    #allocation7 [shape = 's32[2]{0}', space=sflag, size = 0x8, scoped, tag = 'scoped memory for tpu_custom_call.1']
    #allocation8 [shape = 'u8[32768]{0}', space=vmem, size = 0x8000, scoped, tag = 'input window, operand 4, single buffered']
    #allocation9 [shape = 'u8[32768]{0}', space=vmem, size = 0x8000, scoped, tag = 'input window, operand 5, single buffered']
    #allocation10 [shape = 's32[1]{0}', space=sflag, size = 0x4, scoped, tag = 'scoped memory for tpu_custom_call.1']
    #allocation11 [shape = 'u8[262144]{0}', space=vmem, size = 0x40000, scoped, tag = 'output window, operand 0']
    %11 = vsyncpa [#allocation4], 0
    %12 = vsyncpa [#allocation7], 0
    %s13 = scalar_lea.sflag [#allocation7], 1
    %14 = vsyncpa %s13, 0
    %15 = vsyncpa [#allocation10], 0
    %16 = vsyncpa [#allocation5], 0
    %s17 = scalar_lea.sflag [#allocation5], 1
    %18 = vsyncpa %s17, 0
    loop: start=0, step=1, limit=4
    $region2: #{tpu_custom_call.1} parent=1 // loop_pre_header
      _
    $region3: #{tpu_custom_call.1} parent=1 // loop_header
      %s20 = sphi 0, %s24
      %p21 = scmp.ge.s32.totalorder %s20, 4
      %s27 = sphi 0, %s39
      %s28 = sphi 0, %s35
      %s29 = sphi 0, %s27
      %s30 = sphi 0, %s28
      %s31 = sphi 0, %s29
      %s32 = sphi 0, %s30
      %s44 = sphi 0, %s46
      %s47 = sphi 0, %s44
      %s48 = sphi 0, %s47
      %s64 = sphi 0, %s48
      %s70 = sphi 0, %s72
      %s73 = sphi 0, %s70
      %s74 = sphi 0, %s73
      %s90 = sphi 0, %s74
      %s96 = sphi 0, %s98
      %s99 = sphi 0, %s96
      %s100 = sphi 0, %s99
      %s116 = sphi 0, %s100
      %s122 = sphi 0, %s124
      %s125 = sphi 0, %s122
      %s126 = sphi 0, %s125
      %s142 = sphi 0, %s126
      %s146 = sphi 0, %s146
      %s148 = sphi 0, %s146
      %s149 = sphi 0, %s148
      %s163 = sphi 0, %s149
      %s167 = sphi 0, %s167
      %s169 = sphi 0, %s167
      %s170 = sphi 0, %s169
      %s184 = sphi 0, %s170
      %s190 = sphi 0, %s192
      %s193 = sphi 0, %s190
      %s194 = sphi 0, %s193
      %s210 = sphi 0, %s194
    $region4: #{tpu_custom_call.1} parent=1 // loop_header_branch
      %23 = sbr.rel (%p21) target = $region8
    $region5: #{tpu_custom_call.1} parent=1 // loop_body
      %s25 = ssub.s32 %s20, 1
      %s26 = ssub.s32 %s20, 2
      %s33 = sadd.s32 1, %s28
      %p34 = scmp.ge.s32.totalorder %s33, 1
      %s35 = scalar_select %p34, 0, %s33
      %s36 = sadd.s32 1, %s27
      %s37 = scalar_select %p34, %s36, %s27
      %p38 = scmp.ge.s32.totalorder %s37, 2
      %s39 = scalar_select %p38, 0, %s37
      %s40 = ssub.s32 %s27, %s39
      %s41 = ssub.s32 %s28, %s35
      %s42 = sor.u32 %s40, %s41
      %p43 = scmp.eq.s32.totalorder %s42, 0
      %s45 = sadd.s32 %s44, 1
      %s46 = scalar_select %p43, %s44, %s45
      %p49 = pneg %p43
      %p50 = scmp.eq.s32.totalorder %s20, 1
      %p51 = por %p49, %p50
      %p52 = scmp.ne.s32.totalorder %s44, %s47
      %p53 = scmp.eq.s32.totalorder %s20, 0
      %p54 = por %p52, %p53
      %p55 = scmp.ne.s32.totalorder %s44, %s47
      %p56 = scmp.eq.s32.totalorder %s25, 1
      %p57 = por %p55, %p56
      %p58 = scmp.ne.s32.totalorder %s47, %s48
      %p59 = scmp.eq.s32.totalorder %s25, 0
      %p60 = por %p58, %p59
      %p61 = scmp.ne.s32.totalorder %s47, %s48
      %p62 = scmp.eq.s32.totalorder %s26, 1
      %p63 = por %p61, %p62
      %p65 = scmp.ne.s32.totalorder %s48, %s64
      %p66 = scmp.eq.s32.totalorder %s26, 0
      %p67 = por %p65, %p66
      %s68 = ssub.s32 %s28, %s35
      %p69 = scmp.eq.s32.totalorder %s68, 0
      %s71 = sadd.s32 %s70, 1
      %s72 = scalar_select %p69, %s70, %s71
      %p75 = pneg %p69
      %p76 = scmp.eq.s32.totalorder %s20, 1
      %p77 = por %p75, %p76
      %p78 = scmp.ne.s32.totalorder %s70, %s73
      %p79 = scmp.eq.s32.totalorder %s20, 0
      %p80 = por %p78, %p79
      %p81 = scmp.ne.s32.totalorder %s70, %s73
      %p82 = scmp.eq.s32.totalorder %s25, 1
      %p83 = por %p81, %p82
      %p84 = scmp.ne.s32.totalorder %s73, %s74
      %p85 = scmp.eq.s32.totalorder %s25, 0
      %p86 = por %p84, %p85
      %p87 = scmp.ne.s32.totalorder %s73, %s74
      %p88 = scmp.eq.s32.totalorder %s26, 1
      %p89 = por %p87, %p88
      %p91 = scmp.ne.s32.totalorder %s74, %s90
      %p92 = scmp.eq.s32.totalorder %s26, 0
      %p93 = por %p91, %p92
      %s94 = ssub.s32 %s27, %s39
      %p95 = scmp.eq.s32.totalorder %s94, 0
      %s97 = sadd.s32 %s96, 1
      %s98 = scalar_select %p95, %s96, %s97
      %p101 = pneg %p95
      %p102 = scmp.eq.s32.totalorder %s20, 1
      %p103 = por %p101, %p102
      %p104 = scmp.ne.s32.totalorder %s96, %s99
      %p105 = scmp.eq.s32.totalorder %s20, 0
      %p106 = por %p104, %p105
      %p107 = scmp.ne.s32.totalorder %s96, %s99
      %p108 = scmp.eq.s32.totalorder %s25, 1
      %p109 = por %p107, %p108
      %p110 = scmp.ne.s32.totalorder %s99, %s100
      %p111 = scmp.eq.s32.totalorder %s25, 0
      %p112 = por %p110, %p111
      %p113 = scmp.ne.s32.totalorder %s99, %s100
      %p114 = scmp.eq.s32.totalorder %s26, 1
      %p115 = por %p113, %p114
      %p117 = scmp.ne.s32.totalorder %s100, %s116
      %p118 = scmp.eq.s32.totalorder %s26, 0
      %p119 = por %p117, %p118
      %s120 = ssub.s32 %s27, %s39
      %p121 = scmp.eq.s32.totalorder %s120, 0
      %s123 = sadd.s32 %s122, 1
      %s124 = scalar_select %p121, %s122, %s123
      %p127 = pneg %p121
      %p128 = scmp.eq.s32.totalorder %s20, 1
      %p129 = por %p127, %p128
      %p130 = scmp.ne.s32.totalorder %s122, %s125
      %p131 = scmp.eq.s32.totalorder %s20, 0
      %p132 = por %p130, %p131
      %p133 = scmp.ne.s32.totalorder %s122, %s125
      %p134 = scmp.eq.s32.totalorder %s25, 1
      %p135 = por %p133, %p134
      %p136 = scmp.ne.s32.totalorder %s125, %s126
      %p137 = scmp.eq.s32.totalorder %s25, 0
      %p138 = por %p136, %p137
      %p139 = scmp.ne.s32.totalorder %s125, %s126
      %p140 = scmp.eq.s32.totalorder %s26, 1
      %p141 = por %p139, %p140
      %p143 = scmp.ne.s32.totalorder %s126, %s142
      %p144 = scmp.eq.s32.totalorder %s26, 0
      %p145 = por %p143, %p144
      %s147 = sadd.s32 %s146, 1
      %p150 = scmp.eq.s32.totalorder %s20, 1
      %p151 = scmp.ne.s32.totalorder %s146, %s148
      %p152 = scmp.eq.s32.totalorder %s20, 0
      %p153 = por %p151, %p152
      %p154 = scmp.ne.s32.totalorder %s146, %s148
      %p155 = scmp.eq.s32.totalorder %s25, 1
      %p156 = por %p154, %p155
      %p157 = scmp.ne.s32.totalorder %s148, %s149
      %p158 = scmp.eq.s32.totalorder %s25, 0
      %p159 = por %p157, %p158
      %p160 = scmp.ne.s32.totalorder %s148, %s149
      %p161 = scmp.eq.s32.totalorder %s26, 1
      %p162 = por %p160, %p161
      %p164 = scmp.ne.s32.totalorder %s149, %s163
      %p165 = scmp.eq.s32.totalorder %s26, 0
      %p166 = por %p164, %p165
      %s168 = sadd.s32 %s167, 1
      %p171 = scmp.eq.s32.totalorder %s20, 1
      %p172 = scmp.ne.s32.totalorder %s167, %s169
      %p173 = scmp.eq.s32.totalorder %s20, 0
      %p174 = por %p172, %p173
      %p175 = scmp.ne.s32.totalorder %s167, %s169
      %p176 = scmp.eq.s32.totalorder %s25, 1
      %p177 = por %p175, %p176
      %p178 = scmp.ne.s32.totalorder %s169, %s170
      %p179 = scmp.eq.s32.totalorder %s25, 0
      %p180 = por %p178, %p179
      %p181 = scmp.ne.s32.totalorder %s169, %s170
      %p182 = scmp.eq.s32.totalorder %s26, 1
      %p183 = por %p181, %p182
      %p185 = scmp.ne.s32.totalorder %s170, %s184
      %p186 = scmp.eq.s32.totalorder %s26, 0
      %p187 = por %p185, %p186
      %s188 = ssub.s32 %s27, %s39
      %p189 = scmp.eq.s32.totalorder %s188, 0
      %s191 = sadd.s32 %s190, 1
      %s192 = scalar_select %p189, %s190, %s191
      %p195 = pneg %p189
      %p196 = scmp.eq.s32.totalorder %s20, 1
      %p197 = por %p195, %p196
      %p198 = scmp.ne.s32.totalorder %s190, %s193
      %p199 = scmp.eq.s32.totalorder %s20, 0
      %p200 = por %p198, %p199
      %p201 = scmp.ne.s32.totalorder %s190, %s193
      %p202 = scmp.eq.s32.totalorder %s25, 1
      %p203 = por %p201, %p202
      %p204 = scmp.ne.s32.totalorder %s193, %s194
      %p205 = scmp.eq.s32.totalorder %s25, 0
      %p206 = por %p204, %p205
      %p207 = scmp.ne.s32.totalorder %s193, %s194
      %p208 = scmp.eq.s32.totalorder %s26, 1
      %p209 = por %p207, %p208
      %p211 = scmp.ne.s32.totalorder %s194, %s210
      %p212 = scmp.eq.s32.totalorder %s26, 0
      %p213 = por %p211, %p212
      %p214 = scmp.le.s32.totalorder 1, %s20
      %p215 = scmp.lt.s32.totalorder %s20, 3
      %p216 = pnand %p214, %p215
      %p217 = pneg %p216
      // Predicated region
      $region9: #{tpu_custom_call.1} parent=5 // pred_check
        _
      $region10: #{tpu_custom_call.1} parent=5 // pred_check_branch
        %219 = sbr.rel (%p216) target = $region12
      $region11: #{tpu_custom_call.1} parent=5 // pred_region
        %s220 = ssub.s32 %s20, 1
        // Predicated region
        $region13: #{tpu_custom_call.1} parent=11 // pred_check
          %p221 = pneg %p86
        $region14: #{tpu_custom_call.1} parent=11 // pred_check_branch
          %223 = sbr.rel (%p221) target = $region16
        $region15: #{tpu_custom_call.1} parent=11 // pred_region
          %s224 = smul.u32 64, %s30
          %s226 = ssub.s32 4096, 4096
          %227 = vsyncadd [#allocation4], %s226
          %s228 = smul.addr %s224, 64
          %s229 = scalar_lea.hbm %s1, %s228
          %s230 = sshll.u32 [#allocation3], 4
          %s231 = int_to_ptr.vmem [resolvable:$true] %s230
          %236 = dma.hbm_to_vmem [thread:$0]  %s229, 4096, %s231, [#allocation4], 64, 64, 4
        $region16: #{tpu_custom_call.1} parent=11 // pred_fallthru
          _
        // Predicated region
        $region17: #{tpu_custom_call.1} parent=11 // pred_check
          %p237 = pneg %p159
        $region18: #{tpu_custom_call.1} parent=11 // pred_check_branch
          %239 = sbr.rel (%p237) target = $region20
        $region19: #{tpu_custom_call.1} parent=11 // pred_region
          %s241 = ssub.s32 1024, 1024
          %242 = vsyncadd [#allocation7], %s241
          %s243 = sshll.u32 [#allocation8], 4
          %s244 = int_to_ptr.vmem [resolvable:$true] %s243
          %249 = dma.hbm_to_vmem [thread:$0]  %s4, 1024, %s244, [#allocation7], 64, 64, 4
        $region20: #{tpu_custom_call.1} parent=11 // pred_fallthru
          _
        // Predicated region
        $region21: #{tpu_custom_call.1} parent=11 // pred_check
          %p250 = pneg %p180
        $region22: #{tpu_custom_call.1} parent=11 // pred_check_branch
          %252 = sbr.rel (%p250) target = $region24
        $region23: #{tpu_custom_call.1} parent=11 // pred_region
          %s254 = ssub.s32 1024, 1024
          %255 = vsyncadd [#allocation10], %s254
          %s256 = sshll.u32 [#allocation9], 4
          %s257 = int_to_ptr.vmem [resolvable:$true] %s256
          %262 = dma.hbm_to_vmem [thread:$0]  %s5, 1024, %s257, [#allocation10], 64, 64, 4
        $region24: #{tpu_custom_call.1} parent=11 // pred_fallthru
          _
      $region12: #{tpu_custom_call.1} parent=5 // pred_fallthru
        _
      %p263 = scmp.lt.s32.totalorder %s20, 2
      // Predicated region
      $region25: #{tpu_custom_call.1} parent=5 // pred_check
        %p264 = pneg %p263
      $region26: #{tpu_custom_call.1} parent=5 // pred_check_branch
        %266 = sbr.rel (%p264) target = $region28
      $region27: #{tpu_custom_call.1} parent=5 // pred_region
        // Predicated region
        $region29: #{tpu_custom_call.1} parent=27 // pred_check
          %p267 = pneg %p54
        $region30: #{tpu_custom_call.1} parent=27 // pred_check_branch
          %269 = sbr.rel (%p267) target = $region32
        $region31: #{tpu_custom_call.1} parent=27 // pred_region
          %s270 = smul.u32 8, %s27
          %s271 = smul.u32 4, %s28
          %p272 = scmp.lt.s32.totalorder %s270, 15
          %s273 = scalar_select %p272, %s270, 15
          %p274 = scmp.lt.s32.totalorder %s271, 3
          %s275 = scalar_select %p274, %s271, 3
          %s276 = smul.addr %s273, 4
          %s277 = sadd.s32 %s275, %s276
          %s278 = smul.addr %s277, 8
          %s279 = scalar_lea.vmem %s0, %s278
          %s280 = smul.u32 8, %s27
          %s281 = smul.u32 4, %s28
        $region32: #{tpu_custom_call.1} parent=27 // pred_fallthru
          _
        // Predicated region
        $region33: #{tpu_custom_call.1} parent=27 // pred_check
          %p282 = pneg %p106
        $region34: #{tpu_custom_call.1} parent=27 // pred_check_branch
          %284 = sbr.rel (%p282) target = $region36
        $region35: #{tpu_custom_call.1} parent=27 // pred_region
          %s285 = sand.u32 %s20, 1
          %s286 = scalar_lea.sflag [#allocation7], %s285
          %s287 = sand.u32 %s96, 1
          %s288 = smul.addr %s287, 128
          %s289 = scalar_lea.vmem [#allocation6], %s288
          %s290 = smul.u32 32, %s27
          %s292 = ssub.s32 2048, 2048
          %293 = vsyncadd %s286, %s292
          %s294 = smul.addr %s290, 64
          %s295 = scalar_lea.hbm %s2, %s294
          %s296 = sshll.u32 %s289, 4
          %s297 = int_to_ptr.vmem [resolvable:$true] %s296
          %302 = dma.hbm_to_vmem [thread:$0]  %s295, 2048, %s297, %s286, 64, 64, 4
        $region36: #{tpu_custom_call.1} parent=27 // pred_fallthru
          _
        // Predicated region
        $region37: #{tpu_custom_call.1} parent=27 // pred_check
          %p303 = pneg %p132
        $region38: #{tpu_custom_call.1} parent=27 // pred_check_branch
          %305 = sbr.rel (%p303) target = $region40
        $region39: #{tpu_custom_call.1} parent=27 // pred_region
          %s306 = smul.u32 32, %s27
          %p307 = scmp.lt.s32.totalorder %s306, 63
          %s308 = scalar_select %p307, %s306, 63
          %s309 = smul.addr %s308, 8
          %s310 = scalar_lea.vmem %s3, %s309
          %s311 = smul.u32 32, %s27
        $region40: #{tpu_custom_call.1} parent=27 // pred_fallthru
          _
      $region28: #{tpu_custom_call.1} parent=5 // pred_fallthru
        _
      %p312 = scmp.le.s32.totalorder 1, %s20
      %p313 = scmp.lt.s32.totalorder %s20, 3
      %p314 = pnand %p312, %p313
      %p315 = pneg %p314
      // Predicated region
      $region41: #{tpu_custom_call.1} parent=5 // pred_check
        _
      $region42: #{tpu_custom_call.1} parent=5 // pred_check_branch
        %317 = sbr.rel (%p314) target = $region44
      $region43: #{tpu_custom_call.1} parent=5 // pred_region
        %s318 = ssub.s32 %s20, 1
        // Predicated region
        $region45: #{tpu_custom_call.1} parent=43 // pred_check
          %p319 = pneg %p86
        $region46: #{tpu_custom_call.1} parent=43 // pred_check_branch
          %321 = sbr.rel (%p319) target = $region48
        $region47: #{tpu_custom_call.1} parent=43 // pred_region
          %322 = dma.done [#allocation4], 4096
        $region48: #{tpu_custom_call.1} parent=43 // pred_fallthru
          _
        %s323 = sand.u32 %s25, 1
        %s324 = scalar_lea.sflag [#allocation7], %s323
        %s325 = sand.u32 %s99, 1
        %s326 = smul.addr %s325, 128
        %s327 = scalar_lea.vmem [#allocation6], %s326
        // Predicated region
        $region49: #{tpu_custom_call.1} parent=43 // pred_check
          %p328 = pneg %p112
        $region50: #{tpu_custom_call.1} parent=43 // pred_check_branch
          %330 = sbr.rel (%p328) target = $region52
        $region51: #{tpu_custom_call.1} parent=43 // pred_region
          %331 = dma.done %s324, 2048
        $region52: #{tpu_custom_call.1} parent=43 // pred_fallthru
          _
        // Predicated region
        $region53: #{tpu_custom_call.1} parent=43 // pred_check
          %p332 = pneg %p159
        $region54: #{tpu_custom_call.1} parent=43 // pred_check_branch
          %334 = sbr.rel (%p332) target = $region56
        $region55: #{tpu_custom_call.1} parent=43 // pred_region
          %335 = dma.done [#allocation7], 1024
        $region56: #{tpu_custom_call.1} parent=43 // pred_fallthru
          _
        // Predicated region
        $region57: #{tpu_custom_call.1} parent=43 // pred_check
          %p336 = pneg %p180
        $region58: #{tpu_custom_call.1} parent=43 // pred_check_branch
          %338 = sbr.rel (%p336) target = $region60
        $region59: #{tpu_custom_call.1} parent=43 // pred_region
          %339 = dma.done [#allocation10], 1024
        $region60: #{tpu_custom_call.1} parent=43 // pred_fallthru
          _
        %s340 = smul.u32 8, %s29
        %s341 = smul.u32 4, %s30
        %p342 = scmp.lt.s32.totalorder %s340, 15
        %s343 = scalar_select %p342, %s340, 15
        %p344 = scmp.lt.s32.totalorder %s341, 3
        %s345 = scalar_select %p344, %s341, 3
        %s346 = smul.addr %s343, 4
        %s347 = sadd.s32 %s345, %s346
        %s348 = smul.addr %s347, 8
        %s349 = scalar_lea.vmem %s0, %s348
        %p350 = pneg %p60
        %p351 = pneg %p57
        %p352 = pneg %p86
        %p353 = pneg %p83
        %s354 = sand.u32 %s25, 1
        %s355 = scalar_lea.sflag [#allocation7], %s354
        %s356 = sand.u32 %s99, 1
        %s357 = smul.addr %s356, 128
        %s358 = scalar_lea.vmem [#allocation6], %s357
        %p359 = pneg %p112
        %p360 = pneg %p109
        %s361 = smul.u32 32, %s29
        %p362 = scmp.lt.s32.totalorder %s361, 63
        %s363 = scalar_select %p362, %s361, 63
        %s364 = smul.addr %s363, 8
        %s365 = scalar_lea.vmem %s3, %s364
        %p366 = pneg %p138
        %p367 = pneg %p135
        %p368 = pneg %p159
        %p369 = pneg %p156
        %p370 = pneg %p180
        %p371 = pneg %p177
        %p372 = pneg %p206
        %p373 = pneg %p203
        %s374 = sand.u32 %s193, 1
        %s375 = scalar_lea.sflag [#allocation5], %s374
        %s376 = sand.u32 %s193, 1
        %s377 = smul.addr %s376, 256
        %s378 = scalar_lea.vmem [#allocation11], %s377
        %s379 = smul.u32 8, %s29
        %s380 = smul.u32 4, %s30
        %p381 = scmp.lt.s32.totalorder %s379, 15
        %s382 = scalar_select %p381, %s379, 15
        %p383 = scmp.lt.s32.totalorder %s380, 3
        %s384 = scalar_select %p383, %s380, 3
        %s385 = smul.addr %s382, 4
        %s386 = sadd.s32 %s384, %s385
        %s387 = smul.addr %s386, 8
        %s388 = scalar_lea.vmem %s0, %s387
        %s389 = smul.u32 8, %s29
        %s390 = smul.u32 4, %s30
        %s391 = smul.u32 64, %s30
        %s392 = smul.u32 32, %s29
        %s393 = smul.u32 32, %s29
        %p394 = scmp.lt.s32.totalorder %s393, 63
        %s395 = scalar_select %p394, %s393, 63
        %s396 = smul.addr %s395, 8
        %s397 = scalar_lea.vmem %s3, %s396
        %s398 = smul.u32 32, %s29
        %s399 = smul.u32 32, %s29
        %p401 = scmp.eq.s32.totalorder %s30, 0
        // Predicated region
        $region61: #{tpu_custom_call.1} parent=43 // pred_check
          %p402 = pneg %p401
        $region62: #{tpu_custom_call.1} parent=43 // pred_check_branch
          %404 = sbr.rel (%p402) target = $region64
        $region63: #{tpu_custom_call.1} parent=43 // pred_region
          %405 = vst [vmem:[#allocation2] sm:$0xff] 0.0
          %406 = vst [vmem:[#allocation2 + $0x8] sm:$0xff] 0.0
          %407 = vst [vmem:[#allocation2 + $0x10] sm:$0xff] 0.0
          %408 = vst [vmem:[#allocation2 + $0x18] sm:$0xff] 0.0
          %409 = vst [vmem:[#allocation2 + $0x20] sm:$0xff] 0.0
          %410 = vst [vmem:[#allocation2 + $0x28] sm:$0xff] 0.0
          %411 = vst [vmem:[#allocation2 + $0x30] sm:$0xff] 0.0
          %412 = vst [vmem:[#allocation2 + $0x38] sm:$0xff] 0.0
          %413 = vst [vmem:[#allocation2 + $0x40] sm:$0xff] 0.0
          %414 = vst [vmem:[#allocation2 + $0x48] sm:$0xff] 0.0
          %415 = vst [vmem:[#allocation2 + $0x50] sm:$0xff] 0.0
          %416 = vst [vmem:[#allocation2 + $0x58] sm:$0xff] 0.0
          %417 = vst [vmem:[#allocation2 + $0x60] sm:$0xff] 0.0
          %418 = vst [vmem:[#allocation2 + $0x68] sm:$0xff] 0.0
          %419 = vst [vmem:[#allocation2 + $0x70] sm:$0xff] 0.0
          %420 = vst [vmem:[#allocation2 + $0x78] sm:$0xff] 0.0
          %421 = vst [vmem:[#allocation2 + $0x80] sm:$0xff] 0.0
          %422 = vst [vmem:[#allocation2 + $0x88] sm:$0xff] 0.0
          %423 = vst [vmem:[#allocation2 + $0x90] sm:$0xff] 0.0
          %424 = vst [vmem:[#allocation2 + $0x98] sm:$0xff] 0.0
          %425 = vst [vmem:[#allocation2 + $0xa0] sm:$0xff] 0.0
          %426 = vst [vmem:[#allocation2 + $0xa8] sm:$0xff] 0.0
          %427 = vst [vmem:[#allocation2 + $0xb0] sm:$0xff] 0.0
          %428 = vst [vmem:[#allocation2 + $0xb8] sm:$0xff] 0.0
          %429 = vst [vmem:[#allocation2 + $0xc0] sm:$0xff] 0.0
          %430 = vst [vmem:[#allocation2 + $0xc8] sm:$0xff] 0.0
          %431 = vst [vmem:[#allocation2 + $0xd0] sm:$0xff] 0.0
          %432 = vst [vmem:[#allocation2 + $0xd8] sm:$0xff] 0.0
          %433 = vst [vmem:[#allocation2 + $0xe0] sm:$0xff] 0.0
          %434 = vst [vmem:[#allocation2 + $0xe8] sm:$0xff] 0.0
          %435 = vst [vmem:[#allocation2 + $0xf0] sm:$0xff] 0.0
          %436 = vst [vmem:[#allocation2 + $0xf8] sm:$0xff] 0.0
        $region64: #{tpu_custom_call.1} parent=43 // pred_fallthru
          _
        %v437 = vld [vmem:[%s388] sm:$0xff]
        %v438 = vld [vmem:[%s388 + $0x8] sm:$0xff]
        %v439 = vld [vmem:[%s388 + $0x10] sm:$0xff]
        %v440 = vld [vmem:[%s388 + $0x18] sm:$0xff]
        %v441 = vld [vmem:[%s388 + $0x20] sm:$0xff]
        %v442 = vld [vmem:[%s388 + $0x28] sm:$0xff]
        %v443 = vld [vmem:[%s388 + $0x30] sm:$0xff]
        %v444 = vld [vmem:[%s388 + $0x38] sm:$0xff]
        %v445 = vld [vmem:[%s388 + $0x40] sm:$0xff]
        %v446 = vld [vmem:[%s388 + $0x48] sm:$0xff]
        %v447 = vld [vmem:[%s388 + $0x50] sm:$0xff]
        %v448 = vld [vmem:[%s388 + $0x58] sm:$0xff]
        %v449 = vld [vmem:[%s388 + $0x60] sm:$0xff]
        %v450 = vld [vmem:[%s388 + $0x68] sm:$0xff]
        %v451 = vld [vmem:[%s388 + $0x70] sm:$0xff]
        %v452 = vld [vmem:[%s388 + $0x78] sm:$0xff]
        %v453 = vld [vmem:[%s388 + $0x80] sm:$0xff]
        %v454 = vld [vmem:[%s388 + $0x88] sm:$0xff]
        %v455 = vld [vmem:[%s388 + $0x90] sm:$0xff]
        %v456 = vld [vmem:[%s388 + $0x98] sm:$0xff]
        %v457 = vld [vmem:[%s388 + $0xa0] sm:$0xff]
        %v458 = vld [vmem:[%s388 + $0xa8] sm:$0xff]
        %v459 = vld [vmem:[%s388 + $0xb0] sm:$0xff]
        %v460 = vld [vmem:[%s388 + $0xb8] sm:$0xff]
        %v461 = vld [vmem:[%s388 + $0xc0] sm:$0xff]
        %v462 = vld [vmem:[%s388 + $0xc8] sm:$0xff]
        %v463 = vld [vmem:[%s388 + $0xd0] sm:$0xff]
        %v464 = vld [vmem:[%s388 + $0xd8] sm:$0xff]
        %v465 = vld [vmem:[%s388 + $0xe0] sm:$0xff]
        %v466 = vld [vmem:[%s388 + $0xe8] sm:$0xff]
        %v467 = vld [vmem:[%s388 + $0xf0] sm:$0xff]
        %v468 = vld [vmem:[%s388 + $0xf8] sm:$0xff]
        %v469 = vunpack.c.l.s8.bf16 %v437
        %v470 = vunpack.c.l.s8.bf16 %v438
        %v471 = vunpack.c.l.s8.bf16 %v439
        %v472 = vunpack.c.l.s8.bf16 %v440
        %v473 = vunpack.c.h.s8.bf16 %v437
        %v474 = vunpack.c.h.s8.bf16 %v438
        %v475 = vunpack.c.h.s8.bf16 %v439
        %v476 = vunpack.c.h.s8.bf16 %v440
        %v477 = vunpack.c.l.s8.bf16 %v441
        %v478 = vunpack.c.l.s8.bf16 %v442
        %v479 = vunpack.c.l.s8.bf16 %v443
        %v480 = vunpack.c.l.s8.bf16 %v444
        %v481 = vunpack.c.h.s8.bf16 %v441
        %v482 = vunpack.c.h.s8.bf16 %v442
        %v483 = vunpack.c.h.s8.bf16 %v443
        %v484 = vunpack.c.h.s8.bf16 %v444
        %v485 = vunpack.c.l.s8.bf16 %v445
        %v486 = vunpack.c.l.s8.bf16 %v446
        %v487 = vunpack.c.l.s8.bf16 %v447
        %v488 = vunpack.c.l.s8.bf16 %v448
        %v489 = vunpack.c.h.s8.bf16 %v445
        %v490 = vunpack.c.h.s8.bf16 %v446
        %v491 = vunpack.c.h.s8.bf16 %v447
        %v492 = vunpack.c.h.s8.bf16 %v448
        %v493 = vunpack.c.l.s8.bf16 %v449
        %v494 = vunpack.c.l.s8.bf16 %v450
        %v495 = vunpack.c.l.s8.bf16 %v451
        %v496 = vunpack.c.l.s8.bf16 %v452
        %v497 = vunpack.c.h.s8.bf16 %v449
        %v498 = vunpack.c.h.s8.bf16 %v450
        %v499 = vunpack.c.h.s8.bf16 %v451
        %v500 = vunpack.c.h.s8.bf16 %v452
        %v501 = vunpack.c.l.s8.bf16 %v453
        %v502 = vunpack.c.l.s8.bf16 %v454
        %v503 = vunpack.c.l.s8.bf16 %v455
        %v504 = vunpack.c.l.s8.bf16 %v456
        %v505 = vunpack.c.h.s8.bf16 %v453
        %v506 = vunpack.c.h.s8.bf16 %v454
        %v507 = vunpack.c.h.s8.bf16 %v455
        %v508 = vunpack.c.h.s8.bf16 %v456
        %v509 = vunpack.c.l.s8.bf16 %v457
        %v510 = vunpack.c.l.s8.bf16 %v458
        %v511 = vunpack.c.l.s8.bf16 %v459
        %v512 = vunpack.c.l.s8.bf16 %v460
        %v513 = vunpack.c.h.s8.bf16 %v457
        %v514 = vunpack.c.h.s8.bf16 %v458
        %v515 = vunpack.c.h.s8.bf16 %v459
        %v516 = vunpack.c.h.s8.bf16 %v460
        %v517 = vunpack.c.l.s8.bf16 %v461
        %v518 = vunpack.c.l.s8.bf16 %v462
        %v519 = vunpack.c.l.s8.bf16 %v463
        %v520 = vunpack.c.l.s8.bf16 %v464
        %v521 = vunpack.c.h.s8.bf16 %v461
        %v522 = vunpack.c.h.s8.bf16 %v462
        %v523 = vunpack.c.h.s8.bf16 %v463
        %v524 = vunpack.c.h.s8.bf16 %v464
        %v525 = vunpack.c.l.s8.bf16 %v465
        %v526 = vunpack.c.l.s8.bf16 %v466
        %v527 = vunpack.c.l.s8.bf16 %v467
        %v528 = vunpack.c.l.s8.bf16 %v468
        %v529 = vunpack.c.h.s8.bf16 %v465
        %v530 = vunpack.c.h.s8.bf16 %v466
        %v531 = vunpack.c.h.s8.bf16 %v467
        %v532 = vunpack.c.h.s8.bf16 %v468
        %v533 = vld [vmem:[#allocation2] sm:$0xff]
        %v534 = vld [vmem:[#allocation2 + $0x8] sm:$0xff]
        %v535 = vld [vmem:[#allocation2 + $0x10] sm:$0xff]
        %v536 = vld [vmem:[#allocation2 + $0x18] sm:$0xff]
        %v537 = vld [vmem:[#allocation2 + $0x20] sm:$0xff]
        %v538 = vld [vmem:[#allocation2 + $0x28] sm:$0xff]
        %v539 = vld [vmem:[#allocation2 + $0x30] sm:$0xff]
        %v540 = vld [vmem:[#allocation2 + $0x38] sm:$0xff]
        %v541 = vld [vmem:[#allocation2 + $0x40] sm:$0xff]
        %v542 = vld [vmem:[#allocation2 + $0x48] sm:$0xff]
        %v543 = vld [vmem:[#allocation2 + $0x50] sm:$0xff]
        %v544 = vld [vmem:[#allocation2 + $0x58] sm:$0xff]
        %v545 = vld [vmem:[#allocation2 + $0x60] sm:$0xff]
        %v546 = vld [vmem:[#allocation2 + $0x68] sm:$0xff]
        %v547 = vld [vmem:[#allocation2 + $0x70] sm:$0xff]
        %v548 = vld [vmem:[#allocation2 + $0x78] sm:$0xff]
        %v549 = vld [vmem:[#allocation2 + $0x80] sm:$0xff]
        %v550 = vld [vmem:[#allocation2 + $0x88] sm:$0xff]
        %v551 = vld [vmem:[#allocation2 + $0x90] sm:$0xff]
        %v552 = vld [vmem:[#allocation2 + $0x98] sm:$0xff]
        %v553 = vld [vmem:[#allocation2 + $0xa0] sm:$0xff]
        %v554 = vld [vmem:[#allocation2 + $0xa8] sm:$0xff]
        %v555 = vld [vmem:[#allocation2 + $0xb0] sm:$0xff]
        %v556 = vld [vmem:[#allocation2 + $0xb8] sm:$0xff]
        %v557 = vld [vmem:[#allocation2 + $0xc0] sm:$0xff]
        %v558 = vld [vmem:[#allocation2 + $0xc8] sm:$0xff]
        %v559 = vld [vmem:[#allocation2 + $0xd0] sm:$0xff]
        %v560 = vld [vmem:[#allocation2 + $0xd8] sm:$0xff]
        %v561 = vld [vmem:[#allocation2 + $0xe0] sm:$0xff]
        %v562 = vld [vmem:[#allocation2 + $0xe8] sm:$0xff]
        %v563 = vld [vmem:[#allocation2 + $0xf0] sm:$0xff]
        %v564 = vld [vmem:[#allocation2 + $0xf8] sm:$0xff]
        %v565 = vld [vmem:[#allocation3] sm:$0xf]
        %v566 = vld [vmem:[#allocation3 + $0x4] sm:$0xf]
        %v567 = vld [vmem:[#allocation3 + $0x8] sm:$0xf]
        %v568 = vld [vmem:[#allocation3 + $0xc] sm:$0xf]
        %v569 = vld [vmem:[#allocation3 + $0x10] sm:$0xf]
        %v570 = vld [vmem:[#allocation3 + $0x14] sm:$0xf]
        %v571 = vld [vmem:[#allocation3 + $0x18] sm:$0xf]
        %v572 = vld [vmem:[#allocation3 + $0x1c] sm:$0xf]
        %v573 = vld [vmem:[#allocation3 + $0x20] sm:$0xf]
        %v574 = vld [vmem:[#allocation3 + $0x24] sm:$0xf]
        %v575 = vld [vmem:[#allocation3 + $0x28] sm:$0xf]
        %v576 = vld [vmem:[#allocation3 + $0x2c] sm:$0xf]
        %v577 = vld [vmem:[#allocation3 + $0x30] sm:$0xf]
        %v578 = vld [vmem:[#allocation3 + $0x34] sm:$0xf]
        %v579 = vld [vmem:[#allocation3 + $0x38] sm:$0xf]
        %v580 = vld [vmem:[#allocation3 + $0x3c] sm:$0xf]
        %v581 = vld [vmem:[#allocation3 + $0x40] sm:$0xf]
        %v582 = vld [vmem:[#allocation3 + $0x44] sm:$0xf]
        %v583 = vld [vmem:[#allocation3 + $0x48] sm:$0xf]
        %v584 = vld [vmem:[#allocation3 + $0x4c] sm:$0xf]
        %v585 = vld [vmem:[#allocation3 + $0x50] sm:$0xf]
        %v586 = vld [vmem:[#allocation3 + $0x54] sm:$0xf]
        %v587 = vld [vmem:[#allocation3 + $0x58] sm:$0xf]
        %v588 = vld [vmem:[#allocation3 + $0x5c] sm:$0xf]
        %v589 = vld [vmem:[#allocation3 + $0x60] sm:$0xf]
        %v590 = vld [vmem:[#allocation3 + $0x64] sm:$0xf]
        %v591 = vld [vmem:[#allocation3 + $0x68] sm:$0xf]
        %v592 = vld [vmem:[#allocation3 + $0x6c] sm:$0xf]
        %v593 = vld [vmem:[#allocation3 + $0x70] sm:$0xf]
        %v594 = vld [vmem:[#allocation3 + $0x74] sm:$0xf]
        %v595 = vld [vmem:[#allocation3 + $0x78] sm:$0xf]
        %v596 = vld [vmem:[#allocation3 + $0x7c] sm:$0xf]
        %v597 = vld [vmem:[#allocation3 + $0x80] sm:$0xf]
        %v598 = vld [vmem:[#allocation3 + $0x84] sm:$0xf]
        %v599 = vld [vmem:[#allocation3 + $0x88] sm:$0xf]
        %v600 = vld [vmem:[#allocation3 + $0x8c] sm:$0xf]
        %v601 = vld [vmem:[#allocation3 + $0x90] sm:$0xf]
        %v602 = vld [vmem:[#allocation3 + $0x94] sm:$0xf]
        %v603 = vld [vmem:[#allocation3 + $0x98] sm:$0xf]
        %v604 = vld [vmem:[#allocation3 + $0x9c] sm:$0xf]
        %v605 = vld [vmem:[#allocation3 + $0xa0] sm:$0xf]
        %v606 = vld [vmem:[#allocation3 + $0xa4] sm:$0xf]
        %v607 = vld [vmem:[#allocation3 + $0xa8] sm:$0xf]
        %v608 = vld [vmem:[#allocation3 + $0xac] sm:$0xf]
        %v609 = vld [vmem:[#allocation3 + $0xb0] sm:$0xf]
        %v610 = vld [vmem:[#allocation3 + $0xb4] sm:$0xf]
        %v611 = vld [vmem:[#allocation3 + $0xb8] sm:$0xf]
        %v612 = vld [vmem:[#allocation3 + $0xbc] sm:$0xf]
        %v613 = vld [vmem:[#allocation3 + $0xc0] sm:$0xf]
        %v614 = vld [vmem:[#allocation3 + $0xc4] sm:$0xf]
        %v615 = vld [vmem:[#allocation3 + $0xc8] sm:$0xf]
        %v616 = vld [vmem:[#allocation3 + $0xcc] sm:$0xf]
        %v617 = vld [vmem:[#allocation3 + $0xd0] sm:$0xf]
        %v618 = vld [vmem:[#allocation3 + $0xd4] sm:$0xf]
        %v619 = vld [vmem:[#allocation3 + $0xd8] sm:$0xf]
        %v620 = vld [vmem:[#allocation3 + $0xdc] sm:$0xf]
        %v621 = vld [vmem:[#allocation3 + $0xe0] sm:$0xf]
        %v622 = vld [vmem:[#allocation3 + $0xe4] sm:$0xf]
        %v623 = vld [vmem:[#allocation3 + $0xe8] sm:$0xf]
        %v624 = vld [vmem:[#allocation3 + $0xec] sm:$0xf]
        %v625 = vld [vmem:[#allocation3 + $0xf0] sm:$0xf]
        %v626 = vld [vmem:[#allocation3 + $0xf4] sm:$0xf]
        %v627 = vld [vmem:[#allocation3 + $0xf8] sm:$0xf]
        %v628 = vld [vmem:[#allocation3 + $0xfc] sm:$0xf]
        %v693 = vunpack.c.l.b16 %v565
        %v694 = vunpack.c.l.b16 %v566
        %v695 = vunpack.c.l.b16 %v567
        %v696 = vunpack.c.l.b16 %v568
        %v697 = vunpack.c.l.b16 %v569
        %v698 = vunpack.c.l.b16 %v570
        %v699 = vunpack.c.l.b16 %v571
        %v700 = vunpack.c.l.b16 %v572
        %v701 = vunpack.c.l.b16 %v573
        %v702 = vunpack.c.l.b16 %v574
        %v703 = vunpack.c.l.b16 %v575
        %v704 = vunpack.c.l.b16 %v576
        %v705 = vunpack.c.l.b16 %v577
        %v706 = vunpack.c.l.b16 %v578
        %v707 = vunpack.c.l.b16 %v579
        %v708 = vunpack.c.l.b16 %v580
        %v709 = vunpack.c.l.b16 %v581
        %v710 = vunpack.c.l.b16 %v582
        %v711 = vunpack.c.l.b16 %v583
        %v712 = vunpack.c.l.b16 %v584
        %v713 = vunpack.c.l.b16 %v585
        %v714 = vunpack.c.l.b16 %v586
        %v715 = vunpack.c.l.b16 %v587
        %v716 = vunpack.c.l.b16 %v588
        %v717 = vunpack.c.l.b16 %v589
        %v718 = vunpack.c.l.b16 %v590
        %v719 = vunpack.c.l.b16 %v591
        %v720 = vunpack.c.l.b16 %v592
        %v721 = vunpack.c.l.b16 %v593
        %v722 = vunpack.c.l.b16 %v594
        %v723 = vunpack.c.l.b16 %v595
        %v724 = vunpack.c.l.b16 %v596
        %v725 = vunpack.c.l.b16 %v597
        %v726 = vunpack.c.l.b16 %v598
        %v727 = vunpack.c.l.b16 %v599
        %v728 = vunpack.c.l.b16 %v600
        %v729 = vunpack.c.l.b16 %v601
        %v730 = vunpack.c.l.b16 %v602
        %v731 = vunpack.c.l.b16 %v603
        %v732 = vunpack.c.l.b16 %v604
        %v733 = vunpack.c.l.b16 %v605
        %v734 = vunpack.c.l.b16 %v606
        %v735 = vunpack.c.l.b16 %v607
        %v736 = vunpack.c.l.b16 %v608
        %v737 = vunpack.c.l.b16 %v609
        %v738 = vunpack.c.l.b16 %v610
        %v739 = vunpack.c.l.b16 %v611
        %v740 = vunpack.c.l.b16 %v612
        %v741 = vunpack.c.l.b16 %v613
        %v742 = vunpack.c.l.b16 %v614
        %v743 = vunpack.c.l.b16 %v615
        %v744 = vunpack.c.l.b16 %v616
        %v745 = vunpack.c.l.b16 %v617
        %v746 = vunpack.c.l.b16 %v618
        %v747 = vunpack.c.l.b16 %v619
        %v748 = vunpack.c.l.b16 %v620
        %v749 = vunpack.c.l.b16 %v621
        %v750 = vunpack.c.l.b16 %v622
        %v751 = vunpack.c.l.b16 %v623
        %v752 = vunpack.c.l.b16 %v624
        %v753 = vunpack.c.l.b16 %v625
        %v754 = vunpack.c.l.b16 %v626
        %v755 = vunpack.c.l.b16 %v627
        %v756 = vunpack.c.l.b16 %v628
        %v757 = vpack.c.b16 %v694, %v693
        %v758 = vpack.c.b16 %v696, %v695
        %v759 = vpack.c.b16 %v698, %v697
        %v760 = vpack.c.b16 %v700, %v699
        %v761 = vpack.c.b16 %v702, %v701
        %v762 = vpack.c.b16 %v704, %v703
        %v763 = vpack.c.b16 %v706, %v705
        %v764 = vpack.c.b16 %v708, %v707
        %v765 = vpack.c.b16 %v710, %v709
        %v766 = vpack.c.b16 %v712, %v711
        %v767 = vpack.c.b16 %v714, %v713
        %v768 = vpack.c.b16 %v716, %v715
        %v769 = vpack.c.b16 %v718, %v717
        %v770 = vpack.c.b16 %v720, %v719
        %v771 = vpack.c.b16 %v722, %v721
        %v772 = vpack.c.b16 %v724, %v723
        %v773 = vpack.c.b16 %v726, %v725
        %v774 = vpack.c.b16 %v728, %v727
        %v775 = vpack.c.b16 %v730, %v729
        %v776 = vpack.c.b16 %v732, %v731
        %v777 = vpack.c.b16 %v734, %v733
        %v778 = vpack.c.b16 %v736, %v735
        %v779 = vpack.c.b16 %v738, %v737
        %v780 = vpack.c.b16 %v740, %v739
        %v781 = vpack.c.b16 %v742, %v741
        %v782 = vpack.c.b16 %v744, %v743
        %v783 = vpack.c.b16 %v746, %v745
        %v784 = vpack.c.b16 %v748, %v747
        %v785 = vpack.c.b16 %v750, %v749
        %v786 = vpack.c.b16 %v752, %v751
        %v787 = vpack.c.b16 %v754, %v753
        %v788 = vpack.c.b16 %v756, %v755
        %821 = vmatprep.subr.bf16.mxu0 0
        %822 = vmatpush1.bf16.msra.mxu0 %v757
        %823 = vmatprep.subr.bf16.mxu0 0
        %824 = vmatpush1.bf16.msra.mxu0 %v758
        %825 = vmatprep.subr.bf16.mxu0 0
        %826 = vmatpush1.bf16.msra.mxu0 %v759
        %827 = vmatprep.subr.bf16.mxu0 0
        %828 = vmatpush1.bf16.msra.mxu0 %v760
        %829 = vmatprep.subr.bf16.mxu0 0
        %830 = vmatpush1.bf16.msra.mxu0 %v761
        %831 = vmatprep.subr.bf16.mxu0 0
        %832 = vmatpush1.bf16.msra.mxu0 %v762
        %833 = vmatprep.subr.bf16.mxu0 0
        %834 = vmatpush1.bf16.msra.mxu0 %v763
        %835 = vmatprep.subr.bf16.mxu0 0
        %836 = vmatpush1.bf16.msra.mxu0 %v764
        %837 = vmatprep.subr.bf16.mxu0 0
        %838 = vmatpush1.bf16.msra.mxu0 %v765
        %839 = vmatprep.subr.bf16.mxu0 0
        %840 = vmatpush1.bf16.msra.mxu0 %v766
        %841 = vmatprep.subr.bf16.mxu0 0
        %842 = vmatpush1.bf16.msra.mxu0 %v767
        %843 = vmatprep.subr.bf16.mxu0 0
        %844 = vmatpush1.bf16.msra.mxu0 %v768
        %845 = vmatprep.subr.bf16.mxu0 0
        %846 = vmatpush1.bf16.msra.mxu0 %v769
        %847 = vmatprep.subr.bf16.mxu0 0
        %848 = vmatpush1.bf16.msra.mxu0 %v770
        %849 = vmatprep.subr.bf16.mxu0 0
        %850 = vmatpush1.bf16.msra.mxu0 %v771
        %851 = vmatprep.subr.bf16.mxu0 0
        %852 = vmatpush1.bf16.msra.mxu0 %v772
        %853 = vmatprep.mubr.bf16.mxu0 %v470
        %854 = vmatmul.mubr.bf16.gmra.mrb[0].mxu0 %v469
        %v855 = vpop.f32.mrb[0].mxu0
        %v856 = vadd.f32 0.0, %v855
        %v857 = vpop.f32.mrb[0].mxu0
        %v858 = vpop.f32.mrb[0].mxu0
        %v859 = vadd.f32 0.0, %v858
        %v860 = vpop.f32.mrb[0].mxu0
        %861 = vmatprep.mubr.bf16.mxu0 %v474
        %862 = vmatmul.mubr.bf16.gmra.mrb[0].mxu0 %v473
        %v863 = vpop.f32.mrb[0].mxu0
        %v864 = vadd.f32 0.0, %v863
        %v865 = vpop.f32.mrb[0].mxu0
        %v866 = vpop.f32.mrb[0].mxu0
        %v867 = vadd.f32 0.0, %v866
        %v868 = vpop.f32.mrb[0].mxu0
        %869 = vmatprep.mubr.bf16.mxu0 %v478
        %870 = vmatmul.mubr.bf16.gmra.mrb[0].mxu0 %v477
        %v871 = vpop.f32.mrb[0].mxu0
        %v872 = vadd.f32 0.0, %v871
        %v873 = vpop.f32.mrb[0].mxu0
        %v874 = vpop.f32.mrb[0].mxu0
        %v875 = vadd.f32 0.0, %v874
        %v876 = vpop.f32.mrb[0].mxu0
        %877 = vmatprep.mubr.bf16.mxu0 %v482
        %878 = vmatmul.mubr.bf16.gmra.mrb[0].mxu0 %v481
        %v879 = vpop.f32.mrb[0].mxu0
        %v880 = vadd.f32 0.0, %v879
        %v881 = vpop.f32.mrb[0].mxu0
        %v882 = vpop.f32.mrb[0].mxu0
        %v883 = vadd.f32 0.0, %v882
        %v884 = vpop.f32.mrb[0].mxu0
        %885 = vmatprep.mubr.bf16.mxu0 %v486
        %886 = vmatmul.mubr.bf16.gmra.mrb[0].mxu0 %v485
        %v887 = vpop.f32.mrb[0].mxu0
        %v888 = vadd.f32 0.0, %v887
        %v889 = vpop.f32.mrb[0].mxu0
        %v890 = vpop.f32.mrb[0].mxu0
        %v891 = vadd.f32 0.0, %v890
        %v892 = vpop.f32.mrb[0].mxu0
        %893 = vmatprep.mubr.bf16.mxu0 %v490
        %894 = vmatmul.mubr.bf16.gmra.mrb[0].mxu0 %v489
        %v895 = vpop.f32.mrb[0].mxu0
        %v896 = vadd.f32 0.0, %v895
        %v897 = vpop.f32.mrb[0].mxu0
        %v898 = vpop.f32.mrb[0].mxu0
        %v899 = vadd.f32 0.0, %v898
        %v900 = vpop.f32.mrb[0].mxu0
        %901 = vmatprep.mubr.bf16.mxu0 %v494
        %902 = vmatmul.mubr.bf16.gmra.mrb[0].mxu0 %v493
        %v903 = vpop.f32.mrb[0].mxu0
        %v904 = vadd.f32 0.0, %v903
        %v905 = vpop.f32.mrb[0].mxu0
        %v906 = vpop.f32.mrb[0].mxu0
        %v907 = vadd.f32 0.0, %v906
        %v908 = vpop.f32.mrb[0].mxu0
        %909 = vmatprep.mubr.bf16.mxu0 %v498
        %910 = vmatmul.mubr.bf16.gmra.mrb[0].mxu0 %v497
        %v911 = vpop.f32.mrb[0].mxu0
        %v912 = vadd.f32 0.0, %v911
        %v913 = vpop.f32.mrb[0].mxu0
        %v914 = vpop.f32.mrb[0].mxu0
        %v915 = vadd.f32 0.0, %v914
        %v916 = vpop.f32.mrb[0].mxu0
        %917 = vmatprep.mubr.bf16.mxu0 %v502
        %918 = vmatmul.mubr.bf16.gmra.mrb[0].mxu0 %v501
        %v919 = vpop.f32.mrb[0].mxu0
        %v920 = vadd.f32 0.0, %v919
        %v921 = vpop.f32.mrb[0].mxu0
        %v922 = vpop.f32.mrb[0].mxu0
        %v923 = vadd.f32 0.0, %v922
        %v924 = vpop.f32.mrb[0].mxu0
        %925 = vmatprep.mubr.bf16.mxu0 %v506
        %926 = vmatmul.mubr.bf16.gmra.mrb[0].mxu0 %v505
        %v927 = vpop.f32.mrb[0].mxu0
        %v928 = vadd.f32 0.0, %v927
        %v929 = vpop.f32.mrb[0].mxu0
        %v930 = vpop.f32.mrb[0].mxu0
        %v931 = vadd.f32 0.0, %v930
        %v932 = vpop.f32.mrb[0].mxu0
        %933 = vmatprep.mubr.bf16.mxu0 %v510
        %934 = vmatmul.mubr.bf16.gmra.mrb[0].mxu0 %v509
        %v935 = vpop.f32.mrb[0].mxu0
        %v936 = vadd.f32 0.0, %v935
        %v937 = vpop.f32.mrb[0].mxu0
        %v938 = vpop.f32.mrb[0].mxu0
        %v939 = vadd.f32 0.0, %v938
        %v940 = vpop.f32.mrb[0].mxu0
        %941 = vmatprep.mubr.bf16.mxu0 %v514
        %942 = vmatmul.mubr.bf16.gmra.mrb[0].mxu0 %v513
        %v943 = vpop.f32.mrb[0].mxu0
        %v944 = vadd.f32 0.0, %v943
        %v945 = vpop.f32.mrb[0].mxu0
        %v946 = vpop.f32.mrb[0].mxu0
        %v947 = vadd.f32 0.0, %v946
        %v948 = vpop.f32.mrb[0].mxu0
        %949 = vmatprep.mubr.bf16.mxu0 %v518
        %950 = vmatmul.mubr.bf16.gmra.mrb[0].mxu0 %v517
        %v951 = vpop.f32.mrb[0].mxu0
        %v952 = vadd.f32 0.0, %v951
        %v953 = vpop.f32.mrb[0].mxu0
        %v954 = vpop.f32.mrb[0].mxu0
        %v955 = vadd.f32 0.0, %v954
        %v956 = vpop.f32.mrb[0].mxu0
        %957 = vmatprep.mubr.bf16.mxu0 %v522
        %958 = vmatmul.mubr.bf16.gmra.mrb[0].mxu0 %v521
        %v959 = vpop.f32.mrb[0].mxu0
        %v960 = vadd.f32 0.0, %v959
        %v961 = vpop.f32.mrb[0].mxu0
        %v962 = vpop.f32.mrb[0].mxu0
        %v963 = vadd.f32 0.0, %v962
        %v964 = vpop.f32.mrb[0].mxu0
        %965 = vmatprep.mubr.bf16.mxu0 %v526
        %966 = vmatmul.mubr.bf16.gmra.mrb[0].mxu0 %v525
        %v967 = vpop.f32.mrb[0].mxu0
        %v968 = vadd.f32 0.0, %v967
        %v969 = vpop.f32.mrb[0].mxu0
        %v970 = vpop.f32.mrb[0].mxu0
        %v971 = vadd.f32 0.0, %v970
        %v972 = vpop.f32.mrb[0].mxu0
        %973 = vmatprep.mubr.bf16.mxu0 %v530
        %974 = vmatmul.mubr.bf16.gmra.mrb[0].mxu0 %v529
        %v975 = vpop.f32.mrb[0].mxu0
        %v976 = vadd.f32 0.0, %v975
        %v977 = vpop.f32.mrb[0].mxu0
        %v978 = vpop.f32.mrb[0].mxu0
        %v979 = vadd.f32 0.0, %v978
        %v980 = vpop.f32.mrb[0].mxu0
        %981 = vdwg.mxu0
        %982 = vmatprep.subr.bf16.mxu0 0
        %983 = vmatpush1.bf16.msra.mxu0 %v773
        %984 = vmatprep.subr.bf16.mxu0 0
        %985 = vmatpush1.bf16.msra.mxu0 %v774
        %986 = vmatprep.subr.bf16.mxu0 0
        %987 = vmatpush1.bf16.msra.mxu0 %v775
        %988 = vmatprep.subr.bf16.mxu0 0
        %989 = vmatpush1.bf16.msra.mxu0 %v776
        %990 = vmatprep.subr.bf16.mxu0 0
        %991 = vmatpush1.bf16.msra.mxu0 %v777
        %992 = vmatprep.subr.bf16.mxu0 0
        %993 = vmatpush1.bf16.msra.mxu0 %v778
        %994 = vmatprep.subr.bf16.mxu0 0
        %995 = vmatpush1.bf16.msra.mxu0 %v779
        %996 = vmatprep.subr.bf16.mxu0 0
        %997 = vmatpush1.bf16.msra.mxu0 %v780
        %998 = vmatprep.subr.bf16.mxu0 0
        %999 = vmatpush1.bf16.msra.mxu0 %v781
        %1000 = vmatprep.subr.bf16.mxu0 0
        %1001 = vmatpush1.bf16.msra.mxu0 %v782
        %1002 = vmatprep.subr.bf16.mxu0 0
        %1003 = vmatpush1.bf16.msra.mxu0 %v783
        %1004 = vmatprep.subr.bf16.mxu0 0
        %1005 = vmatpush1.bf16.msra.mxu0 %v784
        %1006 = vmatprep.subr.bf16.mxu0 0
        %1007 = vmatpush1.bf16.msra.mxu0 %v785
        %1008 = vmatprep.subr.bf16.mxu0 0
        %1009 = vmatpush1.bf16.msra.mxu0 %v786
        %1010 = vmatprep.subr.bf16.mxu0 0
        %1011 = vmatpush1.bf16.msra.mxu0 %v787
        %1012 = vmatprep.subr.bf16.mxu0 0
        %1013 = vmatpush1.bf16.msra.mxu0 %v788
        %1014 = vmatprep.mubr.bf16.mxu0 %v472
        %1015 = vmatmul.mubr.bf16.gmra.mrb[0].mxu0 %v471
        %v1016 = vpop.f32.mrb[0].mxu0
        %v1017 = vadd.f32 %v856, %v1016
        %v1018 = vpop.f32.mrb[0].mxu0
        %v1019 = vpop.f32.mrb[0].mxu0
        %v1020 = vadd.f32 %v859, %v1019
        %v1021 = vpop.f32.mrb[0].mxu0
        %1022 = vmatprep.mubr.bf16.mxu0 %v476
        %1023 = vmatmul.mubr.bf16.gmra.mrb[0].mxu0 %v475
        %v1024 = vpop.f32.mrb[0].mxu0
        %v1025 = vadd.f32 %v864, %v1024
        %v1026 = vpop.f32.mrb[0].mxu0
        %v1027 = vpop.f32.mrb[0].mxu0
        %v1028 = vadd.f32 %v867, %v1027
        %v1029 = vpop.f32.mrb[0].mxu0
        %1030 = vmatprep.mubr.bf16.mxu0 %v480
        %1031 = vmatmul.mubr.bf16.gmra.mrb[0].mxu0 %v479
        %v1032 = vpop.f32.mrb[0].mxu0
        %v1033 = vadd.f32 %v872, %v1032
        %v1034 = vpop.f32.mrb[0].mxu0
        %v1035 = vpop.f32.mrb[0].mxu0
        %v1036 = vadd.f32 %v875, %v1035
        %v1037 = vpop.f32.mrb[0].mxu0
        %1038 = vmatprep.mubr.bf16.mxu0 %v484
        %1039 = vmatmul.mubr.bf16.gmra.mrb[0].mxu0 %v483
        %v1040 = vpop.f32.mrb[0].mxu0
        %v1041 = vadd.f32 %v880, %v1040
        %v1042 = vpop.f32.mrb[0].mxu0
        %v1043 = vpop.f32.mrb[0].mxu0
        %v1044 = vadd.f32 %v883, %v1043
        %v1045 = vpop.f32.mrb[0].mxu0
        %1046 = vmatprep.mubr.bf16.mxu0 %v488
        %1047 = vmatmul.mubr.bf16.gmra.mrb[0].mxu0 %v487
        %v1048 = vpop.f32.mrb[0].mxu0
        %v1049 = vadd.f32 %v888, %v1048
        %v1050 = vpop.f32.mrb[0].mxu0
        %v1051 = vpop.f32.mrb[0].mxu0
        %v1052 = vadd.f32 %v891, %v1051
        %v1053 = vpop.f32.mrb[0].mxu0
        %1054 = vmatprep.mubr.bf16.mxu0 %v492
        %1055 = vmatmul.mubr.bf16.gmra.mrb[0].mxu0 %v491
        %v1056 = vpop.f32.mrb[0].mxu0
        %v1057 = vadd.f32 %v896, %v1056
        %v1058 = vpop.f32.mrb[0].mxu0
        %v1059 = vpop.f32.mrb[0].mxu0
        %v1060 = vadd.f32 %v899, %v1059
        %v1061 = vpop.f32.mrb[0].mxu0
        %1062 = vmatprep.mubr.bf16.mxu0 %v496
        %1063 = vmatmul.mubr.bf16.gmra.mrb[0].mxu0 %v495
        %v1064 = vpop.f32.mrb[0].mxu0
        %v1065 = vadd.f32 %v904, %v1064
        %v1066 = vpop.f32.mrb[0].mxu0
        %v1067 = vpop.f32.mrb[0].mxu0
        %v1068 = vadd.f32 %v907, %v1067
        %v1069 = vpop.f32.mrb[0].mxu0
        %1070 = vmatprep.mubr.bf16.mxu0 %v500
        %1071 = vmatmul.mubr.bf16.gmra.mrb[0].mxu0 %v499
        %v1072 = vpop.f32.mrb[0].mxu0
        %v1073 = vadd.f32 %v912, %v1072
        %v1074 = vpop.f32.mrb[0].mxu0
        %v1075 = vpop.f32.mrb[0].mxu0
        %v1076 = vadd.f32 %v915, %v1075
        %v1077 = vpop.f32.mrb[0].mxu0
        %1078 = vmatprep.mubr.bf16.mxu0 %v504
        %1079 = vmatmul.mubr.bf16.gmra.mrb[0].mxu0 %v503
        %v1080 = vpop.f32.mrb[0].mxu0
        %v1081 = vadd.f32 %v920, %v1080
        %v1082 = vpop.f32.mrb[0].mxu0
        %v1083 = vpop.f32.mrb[0].mxu0
        %v1084 = vadd.f32 %v923, %v1083
        %v1085 = vpop.f32.mrb[0].mxu0
        %1086 = vmatprep.mubr.bf16.mxu0 %v508
        %1087 = vmatmul.mubr.bf16.gmra.mrb[0].mxu0 %v507
        %v1088 = vpop.f32.mrb[0].mxu0
        %v1089 = vadd.f32 %v928, %v1088
        %v1090 = vpop.f32.mrb[0].mxu0
        %v1091 = vpop.f32.mrb[0].mxu0
        %v1092 = vadd.f32 %v931, %v1091
        %v1093 = vpop.f32.mrb[0].mxu0
        %1094 = vmatprep.mubr.bf16.mxu0 %v512
        %1095 = vmatmul.mubr.bf16.gmra.mrb[0].mxu0 %v511
        %v1096 = vpop.f32.mrb[0].mxu0
        %v1097 = vadd.f32 %v936, %v1096
        %v1098 = vpop.f32.mrb[0].mxu0
        %v1099 = vpop.f32.mrb[0].mxu0
        %v1100 = vadd.f32 %v939, %v1099
        %v1101 = vpop.f32.mrb[0].mxu0
        %1102 = vmatprep.mubr.bf16.mxu0 %v516
        %1103 = vmatmul.mubr.bf16.gmra.mrb[0].mxu0 %v515
        %v1104 = vpop.f32.mrb[0].mxu0
        %v1105 = vadd.f32 %v944, %v1104
        %v1106 = vpop.f32.mrb[0].mxu0
        %v1107 = vpop.f32.mrb[0].mxu0
        %v1108 = vadd.f32 %v947, %v1107
        %v1109 = vpop.f32.mrb[0].mxu0
        %1110 = vmatprep.mubr.bf16.mxu0 %v520
        %1111 = vmatmul.mubr.bf16.gmra.mrb[0].mxu0 %v519
        %v1112 = vpop.f32.mrb[0].mxu0
        %v1113 = vadd.f32 %v952, %v1112
        %v1114 = vpop.f32.mrb[0].mxu0
        %v1115 = vpop.f32.mrb[0].mxu0
        %v1116 = vadd.f32 %v955, %v1115
        %v1117 = vpop.f32.mrb[0].mxu0
        %1118 = vmatprep.mubr.bf16.mxu0 %v524
        %1119 = vmatmul.mubr.bf16.gmra.mrb[0].mxu0 %v523
        %v1120 = vpop.f32.mrb[0].mxu0
        %v1121 = vadd.f32 %v960, %v1120
        %v1122 = vpop.f32.mrb[0].mxu0
        %v1123 = vpop.f32.mrb[0].mxu0
        %v1124 = vadd.f32 %v963, %v1123
        %v1125 = vpop.f32.mrb[0].mxu0
        %1126 = vmatprep.mubr.bf16.mxu0 %v528
        %1127 = vmatmul.mubr.bf16.gmra.mrb[0].mxu0 %v527
        %v1128 = vpop.f32.mrb[0].mxu0
        %v1129 = vadd.f32 %v968, %v1128
        %v1130 = vpop.f32.mrb[0].mxu0
        %v1131 = vpop.f32.mrb[0].mxu0
        %v1132 = vadd.f32 %v971, %v1131
        %v1133 = vpop.f32.mrb[0].mxu0
        %1134 = vmatprep.mubr.bf16.mxu0 %v532
        %1135 = vmatmul.mubr.bf16.gmra.mrb[0].mxu0 %v531
        %v1136 = vpop.f32.mrb[0].mxu0
        %v1137 = vadd.f32 %v976, %v1136
        %v1138 = vpop.f32.mrb[0].mxu0
        %v1139 = vpop.f32.mrb[0].mxu0
        %v1140 = vadd.f32 %v979, %v1139
        %v1141 = vpop.f32.mrb[0].mxu0
        %1142 = vdwg.mxu0
        %v1143 = vadd.f32 %v533, %v1017
        %v1144 = vadd.f32 %v534, %v1020
        %v1145 = vadd.f32 %v535, %v1025
        %v1146 = vadd.f32 %v536, %v1028
        %v1147 = vadd.f32 %v537, %v1033
        %v1148 = vadd.f32 %v538, %v1036
        %v1149 = vadd.f32 %v539, %v1041
        %v1150 = vadd.f32 %v540, %v1044
        %v1151 = vadd.f32 %v541, %v1049
        %v1152 = vadd.f32 %v542, %v1052
        %v1153 = vadd.f32 %v543, %v1057
        %v1154 = vadd.f32 %v544, %v1060
        %v1155 = vadd.f32 %v545, %v1065
        %v1156 = vadd.f32 %v546, %v1068
        %v1157 = vadd.f32 %v547, %v1073
        %v1158 = vadd.f32 %v548, %v1076
        %v1159 = vadd.f32 %v549, %v1081
        %v1160 = vadd.f32 %v550, %v1084
        %v1161 = vadd.f32 %v551, %v1089
        %v1162 = vadd.f32 %v552, %v1092
        %v1163 = vadd.f32 %v553, %v1097
        %v1164 = vadd.f32 %v554, %v1100
        %v1165 = vadd.f32 %v555, %v1105
        %v1166 = vadd.f32 %v556, %v1108
        %v1167 = vadd.f32 %v557, %v1113
        %v1168 = vadd.f32 %v558, %v1116
        %v1169 = vadd.f32 %v559, %v1121
        %v1170 = vadd.f32 %v560, %v1124
        %v1171 = vadd.f32 %v561, %v1129
        %v1172 = vadd.f32 %v562, %v1132
        %v1173 = vadd.f32 %v563, %v1137
        %v1174 = vadd.f32 %v564, %v1140
        %1175 = vst [vmem:[#allocation2] sm:$0xff] %v1143
        %1176 = vst [vmem:[#allocation2 + $0x8] sm:$0xff] %v1144
        %1177 = vst [vmem:[#allocation2 + $0x10] sm:$0xff] %v1145
        %1178 = vst [vmem:[#allocation2 + $0x18] sm:$0xff] %v1146
        %1179 = vst [vmem:[#allocation2 + $0x20] sm:$0xff] %v1147
        %1180 = vst [vmem:[#allocation2 + $0x28] sm:$0xff] %v1148
        %1181 = vst [vmem:[#allocation2 + $0x30] sm:$0xff] %v1149
        %1182 = vst [vmem:[#allocation2 + $0x38] sm:$0xff] %v1150
        %1183 = vst [vmem:[#allocation2 + $0x40] sm:$0xff] %v1151
        %1184 = vst [vmem:[#allocation2 + $0x48] sm:$0xff] %v1152
        %1185 = vst [vmem:[#allocation2 + $0x50] sm:$0xff] %v1153
        %1186 = vst [vmem:[#allocation2 + $0x58] sm:$0xff] %v1154
        %1187 = vst [vmem:[#allocation2 + $0x60] sm:$0xff] %v1155
        %1188 = vst [vmem:[#allocation2 + $0x68] sm:$0xff] %v1156
        %1189 = vst [vmem:[#allocation2 + $0x70] sm:$0xff] %v1157
        %1190 = vst [vmem:[#allocation2 + $0x78] sm:$0xff] %v1158
        %1191 = vst [vmem:[#allocation2 + $0x80] sm:$0xff] %v1159
        %1192 = vst [vmem:[#allocation2 + $0x88] sm:$0xff] %v1160
        %1193 = vst [vmem:[#allocation2 + $0x90] sm:$0xff] %v1161
        %1194 = vst [vmem:[#allocation2 + $0x98] sm:$0xff] %v1162
        %1195 = vst [vmem:[#allocation2 + $0xa0] sm:$0xff] %v1163
        %1196 = vst [vmem:[#allocation2 + $0xa8] sm:$0xff] %v1164
        %1197 = vst [vmem:[#allocation2 + $0xb0] sm:$0xff] %v1165
        %1198 = vst [vmem:[#allocation2 + $0xb8] sm:$0xff] %v1166
        %1199 = vst [vmem:[#allocation2 + $0xc0] sm:$0xff] %v1167
        %1200 = vst [vmem:[#allocation2 + $0xc8] sm:$0xff] %v1168
        %1201 = vst [vmem:[#allocation2 + $0xd0] sm:$0xff] %v1169
        %1202 = vst [vmem:[#allocation2 + $0xd8] sm:$0xff] %v1170
        %1203 = vst [vmem:[#allocation2 + $0xe0] sm:$0xff] %v1171
        %1204 = vst [vmem:[#allocation2 + $0xe8] sm:$0xff] %v1172
        %1205 = vst [vmem:[#allocation2 + $0xf0] sm:$0xff] %v1173
        %1206 = vst [vmem:[#allocation2 + $0xf8] sm:$0xff] %v1174
        // Predicated region
        $region65: #{tpu_custom_call.1} parent=43 // pred_check
          %p1207 = pneg %p401
        $region66: #{tpu_custom_call.1} parent=43 // pred_check_branch
          %1209 = sbr.rel (%p1207) target = $region68
        $region67: #{tpu_custom_call.1} parent=43 // pred_region
          %v1210 = vld [vmem:[#allocation2] sm:$0xff]
          %v1211 = vld [vmem:[#allocation2 + $0x8] sm:$0xff]
          %v1212 = vld [vmem:[#allocation2 + $0x10] sm:$0xff]
          %v1213 = vld [vmem:[#allocation2 + $0x18] sm:$0xff]
          %v1214 = vld [vmem:[#allocation2 + $0x20] sm:$0xff]
          %v1215 = vld [vmem:[#allocation2 + $0x28] sm:$0xff]
          %v1216 = vld [vmem:[#allocation2 + $0x30] sm:$0xff]
          %v1217 = vld [vmem:[#allocation2 + $0x38] sm:$0xff]
          %v1218 = vld [vmem:[#allocation2 + $0x40] sm:$0xff]
          %v1219 = vld [vmem:[#allocation2 + $0x48] sm:$0xff]
          %v1220 = vld [vmem:[#allocation2 + $0x50] sm:$0xff]
          %v1221 = vld [vmem:[#allocation2 + $0x58] sm:$0xff]
          %v1222 = vld [vmem:[#allocation2 + $0x60] sm:$0xff]
          %v1223 = vld [vmem:[#allocation2 + $0x68] sm:$0xff]
          %v1224 = vld [vmem:[#allocation2 + $0x70] sm:$0xff]
          %v1225 = vld [vmem:[#allocation2 + $0x78] sm:$0xff]
          %v1226 = vld [vmem:[#allocation2 + $0x80] sm:$0xff]
          %v1227 = vld [vmem:[#allocation2 + $0x88] sm:$0xff]
          %v1228 = vld [vmem:[#allocation2 + $0x90] sm:$0xff]
          %v1229 = vld [vmem:[#allocation2 + $0x98] sm:$0xff]
          %v1230 = vld [vmem:[#allocation2 + $0xa0] sm:$0xff]
          %v1231 = vld [vmem:[#allocation2 + $0xa8] sm:$0xff]
          %v1232 = vld [vmem:[#allocation2 + $0xb0] sm:$0xff]
          %v1233 = vld [vmem:[#allocation2 + $0xb8] sm:$0xff]
          %v1234 = vld [vmem:[#allocation2 + $0xc0] sm:$0xff]
          %v1235 = vld [vmem:[#allocation2 + $0xc8] sm:$0xff]
          %v1236 = vld [vmem:[#allocation2 + $0xd0] sm:$0xff]
          %v1237 = vld [vmem:[#allocation2 + $0xd8] sm:$0xff]
          %v1238 = vld [vmem:[#allocation2 + $0xe0] sm:$0xff]
          %v1239 = vld [vmem:[#allocation2 + $0xe8] sm:$0xff]
          %v1240 = vld [vmem:[#allocation2 + $0xf0] sm:$0xff]
          %v1241 = vld [vmem:[#allocation2 + $0xf8] sm:$0xff]
          %v1242 = vld [vmem:[%s397] sm:$0xff]
          %v1243 = vld [vmem:[%s397 + $0x8] sm:$0xff]
          %v1244 = vld [vmem:[%s397 + $0x10] sm:$0xff]
          %v1245 = vld [vmem:[%s397 + $0x18] sm:$0xff]
          %v1246 = vld [vmem:[%s397 + $0x20] sm:$0xff]
          %v1247 = vld [vmem:[%s397 + $0x28] sm:$0xff]
          %v1248 = vld [vmem:[%s397 + $0x30] sm:$0xff]
          %v1249 = vld [vmem:[%s397 + $0x38] sm:$0xff]
          %v1250 = vld [vmem:[%s397 + $0x40] sm:$0xff]
          %v1251 = vld [vmem:[%s397 + $0x48] sm:$0xff]
          %v1252 = vld [vmem:[%s397 + $0x50] sm:$0xff]
          %v1253 = vld [vmem:[%s397 + $0x58] sm:$0xff]
          %v1254 = vld [vmem:[%s397 + $0x60] sm:$0xff]
          %v1255 = vld [vmem:[%s397 + $0x68] sm:$0xff]
          %v1256 = vld [vmem:[%s397 + $0x70] sm:$0xff]
          %v1257 = vld [vmem:[%s397 + $0x78] sm:$0xff]
          %v1258 = vld [vmem:[%s397 + $0x80] sm:$0xff]
          %v1259 = vld [vmem:[%s397 + $0x88] sm:$0xff]
          %v1260 = vld [vmem:[%s397 + $0x90] sm:$0xff]
          %v1261 = vld [vmem:[%s397 + $0x98] sm:$0xff]
          %v1262 = vld [vmem:[%s397 + $0xa0] sm:$0xff]
          %v1263 = vld [vmem:[%s397 + $0xa8] sm:$0xff]
          %v1264 = vld [vmem:[%s397 + $0xb0] sm:$0xff]
          %v1265 = vld [vmem:[%s397 + $0xb8] sm:$0xff]
          %v1266 = vld [vmem:[%s397 + $0xc0] sm:$0xff]
          %v1267 = vld [vmem:[%s397 + $0xc8] sm:$0xff]
          %v1268 = vld [vmem:[%s397 + $0xd0] sm:$0xff]
          %v1269 = vld [vmem:[%s397 + $0xd8] sm:$0xff]
          %v1270 = vld [vmem:[%s397 + $0xe0] sm:$0xff]
          %v1271 = vld [vmem:[%s397 + $0xe8] sm:$0xff]
          %v1272 = vld [vmem:[%s397 + $0xf0] sm:$0xff]
          %v1273 = vld [vmem:[%s397 + $0xf8] sm:$0xff]
          %1275 = vset.pattern.permute.xlu0 0
          %1276 = vperm.xlu0 %1275, %v1242
          %v1277 = vpop.permute.xlu0 %1276
          %1280 = vset.pattern.permute.xlu0 0
          %1281 = vperm.xlu0 %1280, %v1243
          %v1282 = vpop.permute.xlu0 %1281
          %1285 = vset.pattern.permute.xlu0 0
          %1286 = vperm.xlu0 %1285, %v1244
          %v1287 = vpop.permute.xlu0 %1286
          %1290 = vset.pattern.permute.xlu0 0
          %1291 = vperm.xlu0 %1290, %v1245
          %v1292 = vpop.permute.xlu0 %1291
          %1295 = vset.pattern.permute.xlu0 0
          %1296 = vperm.xlu0 %1295, %v1246
          %v1297 = vpop.permute.xlu0 %1296
          %1300 = vset.pattern.permute.xlu0 0
          %1301 = vperm.xlu0 %1300, %v1247
          %v1302 = vpop.permute.xlu0 %1301
          %1305 = vset.pattern.permute.xlu0 0
          %1306 = vperm.xlu0 %1305, %v1248
          %v1307 = vpop.permute.xlu0 %1306
          %1310 = vset.pattern.permute.xlu0 0
          %1311 = vperm.xlu0 %1310, %v1249
          %v1312 = vpop.permute.xlu0 %1311
          %1315 = vset.pattern.permute.xlu0 0
          %1316 = vperm.xlu0 %1315, %v1250
          %v1317 = vpop.permute.xlu0 %1316
          %1320 = vset.pattern.permute.xlu0 0
          %1321 = vperm.xlu0 %1320, %v1251
          %v1322 = vpop.permute.xlu0 %1321
          %1325 = vset.pattern.permute.xlu0 0
          %1326 = vperm.xlu0 %1325, %v1252
          %v1327 = vpop.permute.xlu0 %1326
          %1330 = vset.pattern.permute.xlu0 0
          %1331 = vperm.xlu0 %1330, %v1253
          %v1332 = vpop.permute.xlu0 %1331
          %1335 = vset.pattern.permute.xlu0 0
          %1336 = vperm.xlu0 %1335, %v1254
          %v1337 = vpop.permute.xlu0 %1336
          %1340 = vset.pattern.permute.xlu0 0
          %1341 = vperm.xlu0 %1340, %v1255
          %v1342 = vpop.permute.xlu0 %1341
          %1345 = vset.pattern.permute.xlu0 0
          %1346 = vperm.xlu0 %1345, %v1256
          %v1347 = vpop.permute.xlu0 %1346
          %1350 = vset.pattern.permute.xlu0 0
          %1351 = vperm.xlu0 %1350, %v1257
          %v1352 = vpop.permute.xlu0 %1351
          %1355 = vset.pattern.permute.xlu0 0
          %1356 = vperm.xlu0 %1355, %v1258
          %v1357 = vpop.permute.xlu0 %1356
          %1360 = vset.pattern.permute.xlu0 0
          %1361 = vperm.xlu0 %1360, %v1259
          %v1362 = vpop.permute.xlu0 %1361
          %1365 = vset.pattern.permute.xlu0 0
          %1366 = vperm.xlu0 %1365, %v1260
          %v1367 = vpop.permute.xlu0 %1366
          %1370 = vset.pattern.permute.xlu0 0
          %1371 = vperm.xlu0 %1370, %v1261
          %v1372 = vpop.permute.xlu0 %1371
          %1375 = vset.pattern.permute.xlu0 0
          %1376 = vperm.xlu0 %1375, %v1262
          %v1377 = vpop.permute.xlu0 %1376
          %1380 = vset.pattern.permute.xlu0 0
          %1381 = vperm.xlu0 %1380, %v1263
          %v1382 = vpop.permute.xlu0 %1381
          %1385 = vset.pattern.permute.xlu0 0
          %1386 = vperm.xlu0 %1385, %v1264
          %v1387 = vpop.permute.xlu0 %1386
          %1390 = vset.pattern.permute.xlu0 0
          %1391 = vperm.xlu0 %1390, %v1265
          %v1392 = vpop.permute.xlu0 %1391
          %1395 = vset.pattern.permute.xlu0 0
          %1396 = vperm.xlu0 %1395, %v1266
          %v1397 = vpop.permute.xlu0 %1396
          %1400 = vset.pattern.permute.xlu0 0
          %1401 = vperm.xlu0 %1400, %v1267
          %v1402 = vpop.permute.xlu0 %1401
          %1405 = vset.pattern.permute.xlu0 0
          %1406 = vperm.xlu0 %1405, %v1268
          %v1407 = vpop.permute.xlu0 %1406
          %1410 = vset.pattern.permute.xlu0 0
          %1411 = vperm.xlu0 %1410, %v1269
          %v1412 = vpop.permute.xlu0 %1411
          %1415 = vset.pattern.permute.xlu0 0
          %1416 = vperm.xlu0 %1415, %v1270
          %v1417 = vpop.permute.xlu0 %1416
          %1420 = vset.pattern.permute.xlu0 0
          %1421 = vperm.xlu0 %1420, %v1271
          %v1422 = vpop.permute.xlu0 %1421
          %1425 = vset.pattern.permute.xlu0 0
          %1426 = vperm.xlu0 %1425, %v1272
          %v1427 = vpop.permute.xlu0 %1426
          %1430 = vset.pattern.permute.xlu0 0
          %1431 = vperm.xlu0 %1430, %v1273
          %v1432 = vpop.permute.xlu0 %1431
          %v1434 = vmul.f32 %v1210, %v1277
          %v1435 = vmul.f32 %v1211, %v1282
          %v1436 = vmul.f32 %v1212, %v1287
          %v1437 = vmul.f32 %v1213, %v1292
          %v1438 = vmul.f32 %v1214, %v1297
          %v1439 = vmul.f32 %v1215, %v1302
          %v1440 = vmul.f32 %v1216, %v1307
          %v1441 = vmul.f32 %v1217, %v1312
          %v1442 = vmul.f32 %v1218, %v1317
          %v1443 = vmul.f32 %v1219, %v1322
          %v1444 = vmul.f32 %v1220, %v1327
          %v1445 = vmul.f32 %v1221, %v1332
          %v1446 = vmul.f32 %v1222, %v1337
          %v1447 = vmul.f32 %v1223, %v1342
          %v1448 = vmul.f32 %v1224, %v1347
          %v1449 = vmul.f32 %v1225, %v1352
          %v1450 = vmul.f32 %v1226, %v1357
          %v1451 = vmul.f32 %v1227, %v1362
          %v1452 = vmul.f32 %v1228, %v1367
          %v1453 = vmul.f32 %v1229, %v1372
          %v1454 = vmul.f32 %v1230, %v1377
          %v1455 = vmul.f32 %v1231, %v1382
          %v1456 = vmul.f32 %v1232, %v1387
          %v1457 = vmul.f32 %v1233, %v1392
          %v1458 = vmul.f32 %v1234, %v1397
          %v1459 = vmul.f32 %v1235, %v1402
          %v1460 = vmul.f32 %v1236, %v1407
          %v1461 = vmul.f32 %v1237, %v1412
          %v1462 = vmul.f32 %v1238, %v1417
          %v1463 = vmul.f32 %v1239, %v1422
          %v1464 = vmul.f32 %v1240, %v1427
          %v1465 = vmul.f32 %v1241, %v1432
          %v1466 = vpack.c.bf16 %v1435, %v1434
          %v1467 = vpack.c.bf16 %v1437, %v1436
          %v1468 = vpack.c.bf16 %v1439, %v1438
          %v1469 = vpack.c.bf16 %v1441, %v1440
          %v1470 = vpack.c.bf16 %v1443, %v1442
          %v1471 = vpack.c.bf16 %v1445, %v1444
          %v1472 = vpack.c.bf16 %v1447, %v1446
          %v1473 = vpack.c.bf16 %v1449, %v1448
          %v1474 = vpack.c.bf16 %v1451, %v1450
          %v1475 = vpack.c.bf16 %v1453, %v1452
          %v1476 = vpack.c.bf16 %v1455, %v1454
          %v1477 = vpack.c.bf16 %v1457, %v1456
          %v1478 = vpack.c.bf16 %v1459, %v1458
          %v1479 = vpack.c.bf16 %v1461, %v1460
          %v1480 = vpack.c.bf16 %v1463, %v1462
          %v1481 = vpack.c.bf16 %v1465, %v1464
          %v1482 = vld [vmem:[%s327] sm:$0xf]
          %v1483 = vld [vmem:[%s327 + $0x4] sm:$0xf]
          %v1484 = vld [vmem:[%s327 + $0x8] sm:$0xf]
          %v1485 = vld [vmem:[%s327 + $0xc] sm:$0xf]
          %v1486 = vld [vmem:[%s327 + $0x10] sm:$0xf]
          %v1487 = vld [vmem:[%s327 + $0x14] sm:$0xf]
          %v1488 = vld [vmem:[%s327 + $0x18] sm:$0xf]
          %v1489 = vld [vmem:[%s327 + $0x1c] sm:$0xf]
          %v1490 = vld [vmem:[%s327 + $0x20] sm:$0xf]
          %v1491 = vld [vmem:[%s327 + $0x24] sm:$0xf]
          %v1492 = vld [vmem:[%s327 + $0x28] sm:$0xf]
          %v1493 = vld [vmem:[%s327 + $0x2c] sm:$0xf]
          %v1494 = vld [vmem:[%s327 + $0x30] sm:$0xf]
          %v1495 = vld [vmem:[%s327 + $0x34] sm:$0xf]
          %v1496 = vld [vmem:[%s327 + $0x38] sm:$0xf]
          %v1497 = vld [vmem:[%s327 + $0x3c] sm:$0xf]
          %v1498 = vld [vmem:[%s327 + $0x40] sm:$0xf]
          %v1499 = vld [vmem:[%s327 + $0x44] sm:$0xf]
          %v1500 = vld [vmem:[%s327 + $0x48] sm:$0xf]
          %v1501 = vld [vmem:[%s327 + $0x4c] sm:$0xf]
          %v1502 = vld [vmem:[%s327 + $0x50] sm:$0xf]
          %v1503 = vld [vmem:[%s327 + $0x54] sm:$0xf]
          %v1504 = vld [vmem:[%s327 + $0x58] sm:$0xf]
          %v1505 = vld [vmem:[%s327 + $0x5c] sm:$0xf]
          %v1506 = vld [vmem:[%s327 + $0x60] sm:$0xf]
          %v1507 = vld [vmem:[%s327 + $0x64] sm:$0xf]
          %v1508 = vld [vmem:[%s327 + $0x68] sm:$0xf]
          %v1509 = vld [vmem:[%s327 + $0x6c] sm:$0xf]
          %v1510 = vld [vmem:[%s327 + $0x70] sm:$0xf]
          %v1511 = vld [vmem:[%s327 + $0x74] sm:$0xf]
          %v1512 = vld [vmem:[%s327 + $0x78] sm:$0xf]
          %v1513 = vld [vmem:[%s327 + $0x7c] sm:$0xf]
          %v1514 = vld [vmem:[#allocation8] sm:$0xf]
          %v1515 = vld [vmem:[#allocation8 + $0x4] sm:$0xf]
          %v1516 = vld [vmem:[#allocation8 + $0x8] sm:$0xf]
          %v1517 = vld [vmem:[#allocation8 + $0xc] sm:$0xf]
          %v1518 = vld [vmem:[#allocation8 + $0x10] sm:$0xf]
          %v1519 = vld [vmem:[#allocation8 + $0x14] sm:$0xf]
          %v1520 = vld [vmem:[#allocation8 + $0x18] sm:$0xf]
          %v1521 = vld [vmem:[#allocation8 + $0x1c] sm:$0xf]
          %v1522 = vld [vmem:[#allocation8 + $0x20] sm:$0xf]
          %v1523 = vld [vmem:[#allocation8 + $0x24] sm:$0xf]
          %v1524 = vld [vmem:[#allocation8 + $0x28] sm:$0xf]
          %v1525 = vld [vmem:[#allocation8 + $0x2c] sm:$0xf]
          %v1526 = vld [vmem:[#allocation8 + $0x30] sm:$0xf]
          %v1527 = vld [vmem:[#allocation8 + $0x34] sm:$0xf]
          %v1528 = vld [vmem:[#allocation8 + $0x38] sm:$0xf]
          %v1529 = vld [vmem:[#allocation8 + $0x3c] sm:$0xf]
          %v1530 = vld [vmem:[#allocation9] sm:$0xf]
          %v1531 = vld [vmem:[#allocation9 + $0x4] sm:$0xf]
          %v1532 = vld [vmem:[#allocation9 + $0x8] sm:$0xf]
          %v1533 = vld [vmem:[#allocation9 + $0xc] sm:$0xf]
          %v1534 = vld [vmem:[#allocation9 + $0x10] sm:$0xf]
          %v1535 = vld [vmem:[#allocation9 + $0x14] sm:$0xf]
          %v1536 = vld [vmem:[#allocation9 + $0x18] sm:$0xf]
          %v1537 = vld [vmem:[#allocation9 + $0x1c] sm:$0xf]
          %v1538 = vld [vmem:[#allocation9 + $0x20] sm:$0xf]
          %v1539 = vld [vmem:[#allocation9 + $0x24] sm:$0xf]
          %v1540 = vld [vmem:[#allocation9 + $0x28] sm:$0xf]
          %v1541 = vld [vmem:[#allocation9 + $0x2c] sm:$0xf]
          %v1542 = vld [vmem:[#allocation9 + $0x30] sm:$0xf]
          %v1543 = vld [vmem:[#allocation9 + $0x34] sm:$0xf]
          %v1544 = vld [vmem:[#allocation9 + $0x38] sm:$0xf]
          %v1545 = vld [vmem:[#allocation9 + $0x3c] sm:$0xf]
          %v1562 = vunpack.c.l.b16 %v1530
          %v1563 = vunpack.c.l.b16 %v1531
          %v1564 = vunpack.c.l.b16 %v1532
          %v1565 = vunpack.c.l.b16 %v1533
          %v1566 = vunpack.c.l.b16 %v1534
          %v1567 = vunpack.c.l.b16 %v1535
          %v1568 = vunpack.c.l.b16 %v1536
          %v1569 = vunpack.c.l.b16 %v1537
          %v1570 = vunpack.c.l.b16 %v1538
          %v1571 = vunpack.c.l.b16 %v1539
          %v1572 = vunpack.c.l.b16 %v1540
          %v1573 = vunpack.c.l.b16 %v1541
          %v1574 = vunpack.c.l.b16 %v1542
          %v1575 = vunpack.c.l.b16 %v1543
          %v1576 = vunpack.c.l.b16 %v1544
          %v1577 = vunpack.c.l.b16 %v1545
          %v1578 = vpack.c.b16 %v1563, %v1562
          %v1579 = vpack.c.b16 %v1565, %v1564
          %v1580 = vpack.c.b16 %v1567, %v1566
          %v1581 = vpack.c.b16 %v1569, %v1568
          %v1582 = vpack.c.b16 %v1571, %v1570
          %v1583 = vpack.c.b16 %v1573, %v1572
          %v1584 = vpack.c.b16 %v1575, %v1574
          %v1585 = vpack.c.b16 %v1577, %v1576
          %1594 = vmatprep.subr.bf16.mxu0 0
          %1595 = vmatpush1.bf16.msra.mxu0 %v1578
          %1596 = vmatprep.subr.bf16.mxu0 0
          %1597 = vmatpush1.bf16.msra.mxu0 %v1579
          %1598 = vmatprep.subr.bf16.mxu0 0
          %1599 = vmatpush1.bf16.msra.mxu0 %v1580
          %1600 = vmatprep.subr.bf16.mxu0 0
          %1601 = vmatpush1.bf16.msra.mxu0 %v1581
          %1602 = vmatprep.subr.bf16.mxu0 0
          %1603 = vmatpush1.bf16.msra.mxu0 %v1582
          %1604 = vmatprep.subr.bf16.mxu0 0
          %1605 = vmatpush1.bf16.msra.mxu0 %v1583
          %1606 = vmatprep.subr.bf16.mxu0 0
          %1607 = vmatpush1.bf16.msra.mxu0 %v1584
          %1608 = vmatprep.subr.bf16.mxu0 0
          %1609 = vmatpush1.bf16.msra.mxu0 %v1585
          %1610 = vmatprep.subr.bf16.mxu0 0
          %1611 = vmatpush1.bf16.msra.mxu0 0
          %1612 = vmatprep.subr.bf16.mxu0 0
          %1613 = vmatpush1.bf16.msra.mxu0 0
          %1614 = vmatprep.subr.bf16.mxu0 0
          %1615 = vmatpush1.bf16.msra.mxu0 0
          %1616 = vmatprep.subr.bf16.mxu0 0
          %1617 = vmatpush1.bf16.msra.mxu0 0
          %1618 = vmatprep.subr.bf16.mxu0 0
          %1619 = vmatpush1.bf16.msra.mxu0 0
          %1620 = vmatprep.subr.bf16.mxu0 0
          %1621 = vmatpush1.bf16.msra.mxu0 0
          %1622 = vmatprep.subr.bf16.mxu0 0
          %1623 = vmatpush1.bf16.msra.mxu0 0
          %1624 = vmatprep.subr.bf16.mxu0 0
          %1625 = vmatpush1.bf16.msra.mxu0 0
          %1626 = vmatprep.mubr.bf16.mxu0 0
          %1627 = vmatmul.mubr.bf16.gmra.mrb[0].mxu0 %v1466
          %v1628 = vpop.f32.mrb[0].mxu0
          %v1629 = vadd.f32 0.0, %v1628
          %v1630 = vpop.f32.mrb[0].mxu0
          %v1631 = vpop.f32.mrb[0].mxu0
          %v1632 = vadd.f32 0.0, %v1631
          %v1633 = vpop.f32.mrb[0].mxu0
          %1634 = vmatprep.mubr.bf16.mxu0 0
          %1635 = vmatmul.mubr.bf16.gmra.mrb[0].mxu0 %v1467
          %v1636 = vpop.f32.mrb[0].mxu0
          %v1637 = vadd.f32 0.0, %v1636
          %v1638 = vpop.f32.mrb[0].mxu0
          %v1639 = vpop.f32.mrb[0].mxu0
          %v1640 = vadd.f32 0.0, %v1639
          %v1641 = vpop.f32.mrb[0].mxu0
          %1642 = vmatprep.mubr.bf16.mxu0 0
          %1643 = vmatmul.mubr.bf16.gmra.mrb[0].mxu0 %v1468
          %v1644 = vpop.f32.mrb[0].mxu0
          %v1645 = vadd.f32 0.0, %v1644
          %v1646 = vpop.f32.mrb[0].mxu0
          %v1647 = vpop.f32.mrb[0].mxu0
          %v1648 = vadd.f32 0.0, %v1647
          %v1649 = vpop.f32.mrb[0].mxu0
          %1650 = vmatprep.mubr.bf16.mxu0 0
          %1651 = vmatmul.mubr.bf16.gmra.mrb[0].mxu0 %v1469
          %v1652 = vpop.f32.mrb[0].mxu0
          %v1653 = vadd.f32 0.0, %v1652
          %v1654 = vpop.f32.mrb[0].mxu0
          %v1655 = vpop.f32.mrb[0].mxu0
          %v1656 = vadd.f32 0.0, %v1655
          %v1657 = vpop.f32.mrb[0].mxu0
          %1658 = vmatprep.mubr.bf16.mxu0 0
          %1659 = vmatmul.mubr.bf16.gmra.mrb[0].mxu0 %v1470
          %v1660 = vpop.f32.mrb[0].mxu0
          %v1661 = vadd.f32 0.0, %v1660
          %v1662 = vpop.f32.mrb[0].mxu0
          %v1663 = vpop.f32.mrb[0].mxu0
          %v1664 = vadd.f32 0.0, %v1663
          %v1665 = vpop.f32.mrb[0].mxu0
          %1666 = vmatprep.mubr.bf16.mxu0 0
          %1667 = vmatmul.mubr.bf16.gmra.mrb[0].mxu0 %v1471
          %v1668 = vpop.f32.mrb[0].mxu0
          %v1669 = vadd.f32 0.0, %v1668
          %v1670 = vpop.f32.mrb[0].mxu0
          %v1671 = vpop.f32.mrb[0].mxu0
          %v1672 = vadd.f32 0.0, %v1671
          %v1673 = vpop.f32.mrb[0].mxu0
          %1674 = vmatprep.mubr.bf16.mxu0 0
          %1675 = vmatmul.mubr.bf16.gmra.mrb[0].mxu0 %v1472
          %v1676 = vpop.f32.mrb[0].mxu0
          %v1677 = vadd.f32 0.0, %v1676
          %v1678 = vpop.f32.mrb[0].mxu0
          %v1679 = vpop.f32.mrb[0].mxu0
          %v1680 = vadd.f32 0.0, %v1679
          %v1681 = vpop.f32.mrb[0].mxu0
          %1682 = vmatprep.mubr.bf16.mxu0 0
          %1683 = vmatmul.mubr.bf16.gmra.mrb[0].mxu0 %v1473
          %v1684 = vpop.f32.mrb[0].mxu0
          %v1685 = vadd.f32 0.0, %v1684
          %v1686 = vpop.f32.mrb[0].mxu0
          %v1687 = vpop.f32.mrb[0].mxu0
          %v1688 = vadd.f32 0.0, %v1687
          %v1689 = vpop.f32.mrb[0].mxu0
          %1690 = vmatprep.mubr.bf16.mxu0 0
          %1691 = vmatmul.mubr.bf16.gmra.mrb[0].mxu0 %v1474
          %v1692 = vpop.f32.mrb[0].mxu0
          %v1693 = vadd.f32 0.0, %v1692
          %v1694 = vpop.f32.mrb[0].mxu0
          %v1695 = vpop.f32.mrb[0].mxu0
          %v1696 = vadd.f32 0.0, %v1695
          %v1697 = vpop.f32.mrb[0].mxu0
          %1698 = vmatprep.mubr.bf16.mxu0 0
          %1699 = vmatmul.mubr.bf16.gmra.mrb[0].mxu0 %v1475
          %v1700 = vpop.f32.mrb[0].mxu0
          %v1701 = vadd.f32 0.0, %v1700
          %v1702 = vpop.f32.mrb[0].mxu0
          %v1703 = vpop.f32.mrb[0].mxu0
          %v1704 = vadd.f32 0.0, %v1703
          %v1705 = vpop.f32.mrb[0].mxu0
          %1706 = vmatprep.mubr.bf16.mxu0 0
          %1707 = vmatmul.mubr.bf16.gmra.mrb[0].mxu0 %v1476
          %v1708 = vpop.f32.mrb[0].mxu0
          %v1709 = vadd.f32 0.0, %v1708
          %v1710 = vpop.f32.mrb[0].mxu0
          %v1711 = vpop.f32.mrb[0].mxu0
          %v1712 = vadd.f32 0.0, %v1711
          %v1713 = vpop.f32.mrb[0].mxu0
          %1714 = vmatprep.mubr.bf16.mxu0 0
          %1715 = vmatmul.mubr.bf16.gmra.mrb[0].mxu0 %v1477
          %v1716 = vpop.f32.mrb[0].mxu0
          %v1717 = vadd.f32 0.0, %v1716
          %v1718 = vpop.f32.mrb[0].mxu0
          %v1719 = vpop.f32.mrb[0].mxu0
          %v1720 = vadd.f32 0.0, %v1719
          %v1721 = vpop.f32.mrb[0].mxu0
          %1722 = vmatprep.mubr.bf16.mxu0 0
          %1723 = vmatmul.mubr.bf16.gmra.mrb[0].mxu0 %v1478
          %v1724 = vpop.f32.mrb[0].mxu0
          %v1725 = vadd.f32 0.0, %v1724
          %v1726 = vpop.f32.mrb[0].mxu0
          %v1727 = vpop.f32.mrb[0].mxu0
          %v1728 = vadd.f32 0.0, %v1727
          %v1729 = vpop.f32.mrb[0].mxu0
          %1730 = vmatprep.mubr.bf16.mxu0 0
          %1731 = vmatmul.mubr.bf16.gmra.mrb[0].mxu0 %v1479
          %v1732 = vpop.f32.mrb[0].mxu0
          %v1733 = vadd.f32 0.0, %v1732
          %v1734 = vpop.f32.mrb[0].mxu0
          %v1735 = vpop.f32.mrb[0].mxu0
          %v1736 = vadd.f32 0.0, %v1735
          %v1737 = vpop.f32.mrb[0].mxu0
          %1738 = vmatprep.mubr.bf16.mxu0 0
          %1739 = vmatmul.mubr.bf16.gmra.mrb[0].mxu0 %v1480
          %v1740 = vpop.f32.mrb[0].mxu0
          %v1741 = vadd.f32 0.0, %v1740
          %v1742 = vpop.f32.mrb[0].mxu0
          %v1743 = vpop.f32.mrb[0].mxu0
          %v1744 = vadd.f32 0.0, %v1743
          %v1745 = vpop.f32.mrb[0].mxu0
          %1746 = vmatprep.mubr.bf16.mxu0 0
          %1747 = vmatmul.mubr.bf16.gmra.mrb[0].mxu0 %v1481
          %v1748 = vpop.f32.mrb[0].mxu0
          %v1749 = vadd.f32 0.0, %v1748
          %v1750 = vpop.f32.mrb[0].mxu0
          %v1751 = vpop.f32.mrb[0].mxu0
          %v1752 = vadd.f32 0.0, %v1751
          %v1753 = vpop.f32.mrb[0].mxu0
          %1754 = vdwg.mxu0
          %v1787 = vunpack.c.l.b16 %v1482
          %v1788 = vunpack.c.l.b16 %v1483
          %v1789 = vunpack.c.l.b16 %v1484
          %v1790 = vunpack.c.l.b16 %v1485
          %v1791 = vunpack.c.l.b16 %v1486
          %v1792 = vunpack.c.l.b16 %v1487
          %v1793 = vunpack.c.l.b16 %v1488
          %v1794 = vunpack.c.l.b16 %v1489
          %v1795 = vunpack.c.l.b16 %v1490
          %v1796 = vunpack.c.l.b16 %v1491
          %v1797 = vunpack.c.l.b16 %v1492
          %v1798 = vunpack.c.l.b16 %v1493
          %v1799 = vunpack.c.l.b16 %v1494
          %v1800 = vunpack.c.l.b16 %v1495
          %v1801 = vunpack.c.l.b16 %v1496
          %v1802 = vunpack.c.l.b16 %v1497
          %v1803 = vunpack.c.l.b16 %v1498
          %v1804 = vunpack.c.l.b16 %v1499
          %v1805 = vunpack.c.l.b16 %v1500
          %v1806 = vunpack.c.l.b16 %v1501
          %v1807 = vunpack.c.l.b16 %v1502
          %v1808 = vunpack.c.l.b16 %v1503
          %v1809 = vunpack.c.l.b16 %v1504
          %v1810 = vunpack.c.l.b16 %v1505
          %v1811 = vunpack.c.l.b16 %v1506
          %v1812 = vunpack.c.l.b16 %v1507
          %v1813 = vunpack.c.l.b16 %v1508
          %v1814 = vunpack.c.l.b16 %v1509
          %v1815 = vunpack.c.l.b16 %v1510
          %v1816 = vunpack.c.l.b16 %v1511
          %v1817 = vunpack.c.l.b16 %v1512
          %v1818 = vunpack.c.l.b16 %v1513
          %v1819 = vpack.c.b16 %v1788, %v1787
          %v1820 = vpack.c.b16 %v1790, %v1789
          %v1821 = vpack.c.b16 %v1792, %v1791
          %v1822 = vpack.c.b16 %v1794, %v1793
          %v1823 = vpack.c.b16 %v1796, %v1795
          %v1824 = vpack.c.b16 %v1798, %v1797
          %v1825 = vpack.c.b16 %v1800, %v1799
          %v1826 = vpack.c.b16 %v1802, %v1801
          %v1827 = vpack.c.b16 %v1804, %v1803
          %v1828 = vpack.c.b16 %v1806, %v1805
          %v1829 = vpack.c.b16 %v1808, %v1807
          %v1830 = vpack.c.b16 %v1810, %v1809
          %v1831 = vpack.c.b16 %v1812, %v1811
          %v1832 = vpack.c.b16 %v1814, %v1813
          %v1833 = vpack.c.b16 %v1816, %v1815
          %v1834 = vpack.c.b16 %v1818, %v1817
          %v1867 = vunpack.c.l.b16 %v1514
          %v1868 = vunpack.c.l.b16 %v1515
          %v1869 = vunpack.c.l.b16 %v1516
          %v1870 = vunpack.c.l.b16 %v1517
          %v1871 = vunpack.c.l.b16 %v1518
          %v1872 = vunpack.c.l.b16 %v1519
          %v1873 = vunpack.c.l.b16 %v1520
          %v1874 = vunpack.c.l.b16 %v1521
          %v1875 = vunpack.c.l.b16 %v1522
          %v1876 = vunpack.c.l.b16 %v1523
          %v1877 = vunpack.c.l.b16 %v1524
          %v1878 = vunpack.c.l.b16 %v1525
          %v1879 = vunpack.c.l.b16 %v1526
          %v1880 = vunpack.c.l.b16 %v1527
          %v1881 = vunpack.c.l.b16 %v1528
          %v1882 = vunpack.c.l.b16 %v1529
          %v1883 = vpack.c.b16 %v1868, %v1867
          %v1884 = vpack.c.b16 %v1870, %v1869
          %v1885 = vpack.c.b16 %v1872, %v1871
          %v1886 = vpack.c.b16 %v1874, %v1873
          %v1887 = vpack.c.b16 %v1876, %v1875
          %v1888 = vpack.c.b16 %v1878, %v1877
          %v1889 = vpack.c.b16 %v1880, %v1879
          %v1890 = vpack.c.b16 %v1882, %v1881
          %1899 = vmatprep.subr.bf16.mxu0 0
          %1900 = vmatpush1.bf16.msra.mxu0 %v1883
          %1901 = vmatprep.subr.bf16.mxu0 0
          %1902 = vmatpush1.bf16.msra.mxu0 %v1884
          %1903 = vmatprep.subr.bf16.mxu0 0
          %1904 = vmatpush1.bf16.msra.mxu0 %v1885
          %1905 = vmatprep.subr.bf16.mxu0 0
          %1906 = vmatpush1.bf16.msra.mxu0 %v1886
          %1907 = vmatprep.subr.bf16.mxu0 0
          %1908 = vmatpush1.bf16.msra.mxu0 %v1887
          %1909 = vmatprep.subr.bf16.mxu0 0
          %1910 = vmatpush1.bf16.msra.mxu0 %v1888
          %1911 = vmatprep.subr.bf16.mxu0 0
          %1912 = vmatpush1.bf16.msra.mxu0 %v1889
          %1913 = vmatprep.subr.bf16.mxu0 0
          %1914 = vmatpush1.bf16.msra.mxu0 %v1890
          %1915 = vmatprep.subr.bf16.mxu0 0
          %1916 = vmatpush1.bf16.msra.mxu0 0
          %1917 = vmatprep.subr.bf16.mxu0 0
          %1918 = vmatpush1.bf16.msra.mxu0 0
          %1919 = vmatprep.subr.bf16.mxu0 0
          %1920 = vmatpush1.bf16.msra.mxu0 0
          %1921 = vmatprep.subr.bf16.mxu0 0
          %1922 = vmatpush1.bf16.msra.mxu0 0
          %1923 = vmatprep.subr.bf16.mxu0 0
          %1924 = vmatpush1.bf16.msra.mxu0 0
          %1925 = vmatprep.subr.bf16.mxu0 0
          %1926 = vmatpush1.bf16.msra.mxu0 0
          %1927 = vmatprep.subr.bf16.mxu0 0
          %1928 = vmatpush1.bf16.msra.mxu0 0
          %1929 = vmatprep.subr.bf16.mxu0 0
          %1930 = vmatpush1.bf16.msra.mxu0 0
          %1931 = vmatprep.mubr.bf16.mxu0 0
          %1932 = vmatmul.mubr.bf16.gmra.mrb[0].mxu0 %v1819
          %v1933 = vpop.f32.mrb[0].mxu0
          %v1934 = vadd.f32 %v1629, %v1933
          %v1935 = vpop.f32.mrb[0].mxu0
          %v1936 = vpop.f32.mrb[0].mxu0
          %v1937 = vadd.f32 %v1632, %v1936
          %v1938 = vpop.f32.mrb[0].mxu0
          %1939 = vmatprep.mubr.bf16.mxu0 0
          %1940 = vmatmul.mubr.bf16.gmra.mrb[0].mxu0 %v1820
          %v1941 = vpop.f32.mrb[0].mxu0
          %v1942 = vadd.f32 %v1637, %v1941
          %v1943 = vpop.f32.mrb[0].mxu0
          %v1944 = vpop.f32.mrb[0].mxu0
          %v1945 = vadd.f32 %v1640, %v1944
          %v1946 = vpop.f32.mrb[0].mxu0
          %1947 = vmatprep.mubr.bf16.mxu0 0
          %1948 = vmatmul.mubr.bf16.gmra.mrb[0].mxu0 %v1821
          %v1949 = vpop.f32.mrb[0].mxu0
          %v1950 = vadd.f32 %v1645, %v1949
          %v1951 = vpop.f32.mrb[0].mxu0
          %v1952 = vpop.f32.mrb[0].mxu0
          %v1953 = vadd.f32 %v1648, %v1952
          %v1954 = vpop.f32.mrb[0].mxu0
          %1955 = vmatprep.mubr.bf16.mxu0 0
          %1956 = vmatmul.mubr.bf16.gmra.mrb[0].mxu0 %v1822
          %v1957 = vpop.f32.mrb[0].mxu0
          %v1958 = vadd.f32 %v1653, %v1957
          %v1959 = vpop.f32.mrb[0].mxu0
          %v1960 = vpop.f32.mrb[0].mxu0
          %v1961 = vadd.f32 %v1656, %v1960
          %v1962 = vpop.f32.mrb[0].mxu0
          %1963 = vmatprep.mubr.bf16.mxu0 0
          %1964 = vmatmul.mubr.bf16.gmra.mrb[0].mxu0 %v1823
          %v1965 = vpop.f32.mrb[0].mxu0
          %v1966 = vadd.f32 %v1661, %v1965
          %v1967 = vpop.f32.mrb[0].mxu0
          %v1968 = vpop.f32.mrb[0].mxu0
          %v1969 = vadd.f32 %v1664, %v1968
          %v1970 = vpop.f32.mrb[0].mxu0
          %1971 = vmatprep.mubr.bf16.mxu0 0
          %1972 = vmatmul.mubr.bf16.gmra.mrb[0].mxu0 %v1824
          %v1973 = vpop.f32.mrb[0].mxu0
          %v1974 = vadd.f32 %v1669, %v1973
          %v1975 = vpop.f32.mrb[0].mxu0
          %v1976 = vpop.f32.mrb[0].mxu0
          %v1977 = vadd.f32 %v1672, %v1976
          %v1978 = vpop.f32.mrb[0].mxu0
          %1979 = vmatprep.mubr.bf16.mxu0 0
          %1980 = vmatmul.mubr.bf16.gmra.mrb[0].mxu0 %v1825
          %v1981 = vpop.f32.mrb[0].mxu0
          %v1982 = vadd.f32 %v1677, %v1981
          %v1983 = vpop.f32.mrb[0].mxu0
          %v1984 = vpop.f32.mrb[0].mxu0
          %v1985 = vadd.f32 %v1680, %v1984
          %v1986 = vpop.f32.mrb[0].mxu0
          %1987 = vmatprep.mubr.bf16.mxu0 0
          %1988 = vmatmul.mubr.bf16.gmra.mrb[0].mxu0 %v1826
          %v1989 = vpop.f32.mrb[0].mxu0
          %v1990 = vadd.f32 %v1685, %v1989
          %v1991 = vpop.f32.mrb[0].mxu0
          %v1992 = vpop.f32.mrb[0].mxu0
          %v1993 = vadd.f32 %v1688, %v1992
          %v1994 = vpop.f32.mrb[0].mxu0
          %1995 = vmatprep.mubr.bf16.mxu0 0
          %1996 = vmatmul.mubr.bf16.gmra.mrb[0].mxu0 %v1827
          %v1997 = vpop.f32.mrb[0].mxu0
          %v1998 = vadd.f32 %v1693, %v1997
          %v1999 = vpop.f32.mrb[0].mxu0
          %v2000 = vpop.f32.mrb[0].mxu0
          %v2001 = vadd.f32 %v1696, %v2000
          %v2002 = vpop.f32.mrb[0].mxu0
          %2003 = vmatprep.mubr.bf16.mxu0 0
          %2004 = vmatmul.mubr.bf16.gmra.mrb[0].mxu0 %v1828
          %v2005 = vpop.f32.mrb[0].mxu0
          %v2006 = vadd.f32 %v1701, %v2005
          %v2007 = vpop.f32.mrb[0].mxu0
          %v2008 = vpop.f32.mrb[0].mxu0
          %v2009 = vadd.f32 %v1704, %v2008
          %v2010 = vpop.f32.mrb[0].mxu0
          %2011 = vmatprep.mubr.bf16.mxu0 0
          %2012 = vmatmul.mubr.bf16.gmra.mrb[0].mxu0 %v1829
          %v2013 = vpop.f32.mrb[0].mxu0
          %v2014 = vadd.f32 %v1709, %v2013
          %v2015 = vpop.f32.mrb[0].mxu0
          %v2016 = vpop.f32.mrb[0].mxu0
          %v2017 = vadd.f32 %v1712, %v2016
          %v2018 = vpop.f32.mrb[0].mxu0
          %2019 = vmatprep.mubr.bf16.mxu0 0
          %2020 = vmatmul.mubr.bf16.gmra.mrb[0].mxu0 %v1830
          %v2021 = vpop.f32.mrb[0].mxu0
          %v2022 = vadd.f32 %v1717, %v2021
          %v2023 = vpop.f32.mrb[0].mxu0
          %v2024 = vpop.f32.mrb[0].mxu0
          %v2025 = vadd.f32 %v1720, %v2024
          %v2026 = vpop.f32.mrb[0].mxu0
          %2027 = vmatprep.mubr.bf16.mxu0 0
          %2028 = vmatmul.mubr.bf16.gmra.mrb[0].mxu0 %v1831
          %v2029 = vpop.f32.mrb[0].mxu0
          %v2030 = vadd.f32 %v1725, %v2029
          %v2031 = vpop.f32.mrb[0].mxu0
          %v2032 = vpop.f32.mrb[0].mxu0
          %v2033 = vadd.f32 %v1728, %v2032
          %v2034 = vpop.f32.mrb[0].mxu0
          %2035 = vmatprep.mubr.bf16.mxu0 0
          %2036 = vmatmul.mubr.bf16.gmra.mrb[0].mxu0 %v1832
          %v2037 = vpop.f32.mrb[0].mxu0
          %v2038 = vadd.f32 %v1733, %v2037
          %v2039 = vpop.f32.mrb[0].mxu0
          %v2040 = vpop.f32.mrb[0].mxu0
          %v2041 = vadd.f32 %v1736, %v2040
          %v2042 = vpop.f32.mrb[0].mxu0
          %2043 = vmatprep.mubr.bf16.mxu0 0
          %2044 = vmatmul.mubr.bf16.gmra.mrb[0].mxu0 %v1833
          %v2045 = vpop.f32.mrb[0].mxu0
          %v2046 = vadd.f32 %v1741, %v2045
          %v2047 = vpop.f32.mrb[0].mxu0
          %v2048 = vpop.f32.mrb[0].mxu0
          %v2049 = vadd.f32 %v1744, %v2048
          %v2050 = vpop.f32.mrb[0].mxu0
          %2051 = vmatprep.mubr.bf16.mxu0 0
          %2052 = vmatmul.mubr.bf16.gmra.mrb[0].mxu0 %v1834
          %v2053 = vpop.f32.mrb[0].mxu0
          %v2054 = vadd.f32 %v1749, %v2053
          %v2055 = vpop.f32.mrb[0].mxu0
          %v2056 = vpop.f32.mrb[0].mxu0
          %v2057 = vadd.f32 %v1752, %v2056
          %v2058 = vpop.f32.mrb[0].mxu0
          %2059 = vdwg.mxu0
          %2060 = vst [vmem:[%s378] sm:$0xff] %v1934
          %2061 = vst [vmem:[%s378 + $0x8] sm:$0xff] %v1937
          %2062 = vst [vmem:[%s378 + $0x10] sm:$0xff] %v1942
          %2063 = vst [vmem:[%s378 + $0x18] sm:$0xff] %v1945
          %2064 = vst [vmem:[%s378 + $0x20] sm:$0xff] %v1950
          %2065 = vst [vmem:[%s378 + $0x28] sm:$0xff] %v1953
          %2066 = vst [vmem:[%s378 + $0x30] sm:$0xff] %v1958
          %2067 = vst [vmem:[%s378 + $0x38] sm:$0xff] %v1961
          %2068 = vst [vmem:[%s378 + $0x40] sm:$0xff] %v1966
          %2069 = vst [vmem:[%s378 + $0x48] sm:$0xff] %v1969
          %2070 = vst [vmem:[%s378 + $0x50] sm:$0xff] %v1974
          %2071 = vst [vmem:[%s378 + $0x58] sm:$0xff] %v1977
          %2072 = vst [vmem:[%s378 + $0x60] sm:$0xff] %v1982
          %2073 = vst [vmem:[%s378 + $0x68] sm:$0xff] %v1985
          %2074 = vst [vmem:[%s378 + $0x70] sm:$0xff] %v1990
          %2075 = vst [vmem:[%s378 + $0x78] sm:$0xff] %v1993
          %2076 = vst [vmem:[%s378 + $0x80] sm:$0xff] %v1998
          %2077 = vst [vmem:[%s378 + $0x88] sm:$0xff] %v2001
          %2078 = vst [vmem:[%s378 + $0x90] sm:$0xff] %v2006
          %2079 = vst [vmem:[%s378 + $0x98] sm:$0xff] %v2009
          %2080 = vst [vmem:[%s378 + $0xa0] sm:$0xff] %v2014
          %2081 = vst [vmem:[%s378 + $0xa8] sm:$0xff] %v2017
          %2082 = vst [vmem:[%s378 + $0xb0] sm:$0xff] %v2022
          %2083 = vst [vmem:[%s378 + $0xb8] sm:$0xff] %v2025
          %2084 = vst [vmem:[%s378 + $0xc0] sm:$0xff] %v2030
          %2085 = vst [vmem:[%s378 + $0xc8] sm:$0xff] %v2033
          %2086 = vst [vmem:[%s378 + $0xd0] sm:$0xff] %v2038
          %2087 = vst [vmem:[%s378 + $0xd8] sm:$0xff] %v2041
          %2088 = vst [vmem:[%s378 + $0xe0] sm:$0xff] %v2046
          %2089 = vst [vmem:[%s378 + $0xe8] sm:$0xff] %v2049
          %2090 = vst [vmem:[%s378 + $0xf0] sm:$0xff] %v2054
          %2091 = vst [vmem:[%s378 + $0xf8] sm:$0xff] %v2057
        $region68: #{tpu_custom_call.1} parent=43 // pred_fallthru
          _
        %s2092 = sand.u32 %s193, 1
        %s2093 = scalar_lea.sflag [#allocation5], %s2092
        %s2094 = sand.u32 %s193, 1
        %s2095 = smul.addr %s2094, 256
        %s2096 = scalar_lea.vmem [#allocation11], %s2095
        // Predicated region
        $region69: #{tpu_custom_call.1} parent=43 // pred_check
          %p2097 = pneg %p203
        $region70: #{tpu_custom_call.1} parent=43 // pred_check_branch
          %2099 = sbr.rel (%p2097) target = $region72
        $region71: #{tpu_custom_call.1} parent=43 // pred_region
          %s2100 = smul.u32 32, %s29
          %s2102 = ssub.s32 4096, 4096
          %2103 = vsyncadd %s2093, %s2102
          %s2104 = smul.addr %s2100, 128
          %s2105 = scalar_lea.hbm %s6, %s2104
          %s2106 = sshll.u32 %s2096, 4
          %s2107 = int_to_ptr.vmem [resolvable:$true] %s2106
          %2112 = dma.vmem_to_hbm [thread:$0]  %s2107, 4096, %s2105, %s2093, 128, 128, 8
        $region72: #{tpu_custom_call.1} parent=43 // pred_fallthru
          _
      $region44: #{tpu_custom_call.1} parent=5 // pred_fallthru
        _
      %p2113 = scmp.le.s32.totalorder 2, %s20
      // Predicated region
      $region73: #{tpu_custom_call.1} parent=5 // pred_check
        %p2114 = pneg %p2113
      $region74: #{tpu_custom_call.1} parent=5 // pred_check_branch
        %2116 = sbr.rel (%p2114) target = $region76
      $region75: #{tpu_custom_call.1} parent=5 // pred_region
        %s2117 = ssub.s32 %s20, 2
        // Predicated region
        $region77: #{tpu_custom_call.1} parent=75 // pred_check
          %p2118 = pneg %p209
        $region78: #{tpu_custom_call.1} parent=75 // pred_check_branch
          %2120 = sbr.rel (%p2118) target = $region80
        $region79: #{tpu_custom_call.1} parent=75 // pred_region
          %s2121 = sand.u32 %s194, 1
          %s2122 = scalar_lea.sflag [#allocation5], %s2121
          %s2123 = sand.u32 %s194, 1
          %s2124 = smul.addr %s2123, 256
          %s2125 = scalar_lea.vmem [#allocation11], %s2124
          %2126 = dma.done %s2122, 4096
        $region80: #{tpu_custom_call.1} parent=75 // pred_fallthru
          _
      $region76: #{tpu_custom_call.1} parent=5 // pred_fallthru
        _
    $region6: #{tpu_custom_call.1} parent=1 // loop_footer
      %s24 = sadd.s32 1, %s20
    $region7: #{tpu_custom_call.1} parent=1 // loop_footer_branch
      %19 = sbr.rel target = $region3
    $region8: #{tpu_custom_call.1} parent=1 // loop_exit
      _
    %2127 = vsyncpa [#allocation4], 1
    %s2128 = scalar_lea.sflag [#allocation4], 1
    %2129 = vsyncpa %s2128, 1
    %2130 = vsyncpa [#allocation7], 1
    %s2131 = scalar_lea.sflag [#allocation7], 1
    %2132 = vsyncpa %s2131, 1
    %2133 = vsyncpa [#allocation10], 1
    %2134 = vsyncpa [#allocation5], 1
    %s2135 = scalar_lea.sflag [#allocation5], 1
    %2136 = vsyncpa %s2135, 1

</llo_original>
